<compile_context>
chip_gen: v5e
topology: v5e:2x2
jax: 0.10.0
libtpu: 0.0.40
codegen_flags: <defaults>
</compile_context>

<pallas_src>
import functools

import jax
import jax.numpy as jnp
from jax.experimental import pallas as pl
from jax.experimental.pallas import tpu as pltpu

_K_IN = 784          # 28 * 28
_HID = 512
_N_CLASSES = 10
_N_OUT_PAD = 128     # lane-dense padded logits width


def _round_up(n, m):
    return ((n + m - 1) // m) * m


def _mlp_kernel(x_ref, w1_ref, b1_ref, w2_ref, b2_ref, w3_ref, b3_ref, o_ref):
    # In-kernel fp32 -> bf16 cast of the activations (hidden under the MXU).
    x = x_ref[...].astype(jnp.bfloat16)
    # Layer 1: (tb, 784)bf16 @ (784, 512)bf16 -> fp32 acc, +bias, ReLU (fp32 VPU path)
    h1 = jnp.dot(x, w1_ref[...], preferred_element_type=jnp.float32)
    h1 = jnp.maximum(h1 + b1_ref[...], 0.0)
    # dropout(p=0.4): identity in eval mode
    # Layer 2: (tb, 512) @ (512, 512)
    h2 = jnp.dot(h1.astype(jnp.bfloat16), w2_ref[...],
                 preferred_element_type=jnp.float32)
    h2 = jnp.maximum(h2 + b2_ref[...], 0.0)
    # dropout(p=0.4): identity in eval mode
    # Layer 3: (tb, 512) @ (512, 128-lane-padded)
    out = jnp.dot(h2.astype(jnp.bfloat16), w3_ref[...],
                  preferred_element_type=jnp.float32) + b3_ref[...]
    o_ref[...] = out.astype(o_ref.dtype)


def prepare_params(params):
    """One-time parameter prep (hoisted out of the per-call path):
    bf16 cast of weights, lane padding of w3/b3 (10 -> 128)."""
    w1, b1, w2, b2, w3, b3 = params
    w1p = w1.astype(jnp.bfloat16)                                 # (784, 512)
    w2p = w2.astype(jnp.bfloat16)                                 # (512, 512)
    w3p = jnp.zeros((_HID, _N_OUT_PAD), jnp.bfloat16).at[:, :_N_CLASSES].set(
        w3.astype(jnp.bfloat16))                                  # (512, 128)
    b1p = jnp.reshape(b1, (1, _HID)).astype(jnp.float32)
    b2p = jnp.reshape(b2, (1, _HID)).astype(jnp.float32)
    b3p = jnp.zeros((1, _N_OUT_PAD), jnp.float32).at[:, :_N_CLASSES].set(b3)
    return (w1p, b1p, w2p, b2p, w3p, b3p)


@functools.partial(jax.jit, static_argnames=("block_b",))
def net2_forward(x, prepared_params, block_b=512):
    """x: (B, 1, 28, 28) or (B, 784) float32.
    prepared_params: output of prepare_params().  Returns logits (B, 10) fp32."""
    w1p, b1p, w2p, b2p, w3p, b3p = prepared_params
    x2d = x.reshape(-1, _K_IN)                    # matches torch x.view(-1, 784)
    B = x2d.shape[0]

    # Batch tile: multiple of 16 (bf16 sublane packing of the casted x), capped
    # at block_b, and capped at round_up(ceil(B/2), 16) so the batch grid has
    # >= 2 steps whenever B allows (v7x megacore).  Tiny batches -> one 16-row
    # tile (weight-DMA-bound regime; tiling can't help there).
    tb = min(block_b, _round_up(max(1, -(-B // 2)), 16))
    tb = max(16, tb)
    grid = (pl.cdiv(B, tb),)                      # ragged last tile masked by Pallas

    out_padded = pl.pallas_call(
        _mlp_kernel,
        out_shape=jax.ShapeDtypeStruct((B, _N_OUT_PAD), jnp.float32),
        grid_spec=pltpu.PrefetchScalarGridSpec(
            num_scalar_prefetch=0,
            grid=grid,
            in_specs=[
                pl.BlockSpec((tb, _K_IN), lambda i: (i, 0)),         # x tile (fp32)
                pl.BlockSpec((_K_IN, _HID), lambda i: (0, 0)),       # w1 (resident)
                pl.BlockSpec((1, _HID), lambda i: (0, 0)),           # b1
                pl.BlockSpec((_HID, _HID), lambda i: (0, 0)),        # w2 (resident)
                pl.BlockSpec((1, _HID), lambda i: (0, 0)),           # b2
                pl.BlockSpec((_HID, _N_OUT_PAD), lambda i: (0, 0)),  # w3 (padded)
                pl.BlockSpec((1, _N_OUT_PAD), lambda i: (0, 0)),     # b3 (padded)
            ],
            out_specs=pl.BlockSpec((tb, _N_OUT_PAD), lambda i: (i, 0)),
        ),
        compiler_params=pltpu.CompilerParams(
            dimension_semantics=("parallel",),
        ),
    )(x2d, w1p, b1p, w2p, b2p, w3p, b3p)

    return out_padded[:, :_N_CLASSES]


def init_params(key):
    """Deterministic init matching nn.Linear's default U(-1/sqrt(fan_in), 1/sqrt(fan_in))."""
    def linear(key, fan_in, fan_out):
        kw, kb = jax.random.split(key)
        bound = 1.0 / jnp.sqrt(float(fan_in))
        # Stored as (in, out) so the kernel computes x @ W (== torch x @ W.T).
        w = jax.random.uniform(kw, (fan_in, fan_out), jnp.float32, -bound, bound)
        b = jax.random.uniform(kb, (fan_out,), jnp.float32, -bound, bound)
        return w, b

    k1, k2, k3 = jax.random.split(key, 3)
    w1, b1 = linear(k1, _K_IN, _HID)
    w2, b2 = linear(k2, _HID, _HID)
    w3, b3 = linear(k3, _HID, _N_CLASSES)
    return (w1, b1, w2, b2, w3, b3)


def _reference_forward_bf16(x, params):
    """Plain-JAX reference emulating the kernel's bf16-input / fp32-accum numerics."""
    w1, b1, w2, b2, w3, b3 = params
    bf = jnp.bfloat16
    h = x.reshape(-1, _K_IN).astype(bf)
    h = jnp.maximum(
        jnp.dot(h, w1.astype(bf), preferred_element_type=jnp.float32) + b1, 0.0)
    h = jnp.maximum(
        jnp.dot(h.astype(bf), w2.astype(bf), preferred_element_type=jnp.float32) + b2, 0.0)
    return jnp.dot(h.astype(bf), w3.astype(bf), preferred_element_type=jnp.float32) + b3


def _reference_forward_f32(x, params):
    """Full-precision reference (semantic check, loose tolerance vs bf16 kernel)."""
    w1, b1, w2, b2, w3, b3 = params
    h = x.reshape(-1, _K_IN)
    h = jnp.maximum(h @ w1 + b1, 0.0)
    h = jnp.maximum(h @ w2 + b2, 0.0)
    return h @ w3 + b3


if __name__ == "__main__":
    key = jax.random.PRNGKey(0)
    kp, kx1, kx2 = jax.random.split(key, 3)
    params = init_params(kp)
    prepared = prepare_params(params)          # one-time: bf16 cast + lane pad

    # MNIST-like input, NCHW: (batch=8, channels=1, 28, 28) -- single ragged tile.
    x_small = jax.random.normal(kx1, (8, 1, 28, 28), jnp.float32)
    out_small = jax.block_until_ready(net2_forward(x_small, prepared))
    assert out_small.shape == (8, _N_CLASSES), out_small.shape
    assert jnp.allclose(out_small, _reference_forward_bf16(x_small, params),
                        atol=2e-3, rtol=2e-3), "small-B mismatch vs bf16 reference"
    assert jnp.allclose(out_small, _reference_forward_f32(x_small, params),
                        atol=1e-1, rtol=1e-1), "small-B mismatch vs fp32 reference"

    # Larger, non-multiple batch: multiple grid steps + ragged last tile.
    x_big = jax.random.normal(kx2, (300, 1, 28, 28), jnp.float32)
    out_big = jax.block_until_ready(net2_forward(x_big, prepared))
    assert out_big.shape == (300, _N_CLASSES), out_big.shape
    assert jnp.allclose(out_big, _reference_forward_bf16(x_big, params),
                        atol=2e-3, rtol=2e-3), "ragged-B mismatch vs bf16 reference"
    assert jnp.allclose(out_big, _reference_forward_f32(x_big, params),
                        atol=1e-1, rtol=1e-1), "ragged-B mismatch vs fp32 reference"

    print("KERNEL_OK")
</pallas_src>

<mosaic_0001>
module attributes {stable_mosaic.version = 11 : i64} {
  func.func @_mlp_kernel(%arg0: i32, %arg1: memref<16x784xf32, #tpu.memory_space<vmem>>, %arg2: memref<784x512xbf16, #tpu.memory_space<vmem>>, %arg3: memref<1x512xf32, #tpu.memory_space<vmem>>, %arg4: memref<512x512xbf16, #tpu.memory_space<vmem>>, %arg5: memref<1x512xf32, #tpu.memory_space<vmem>>, %arg6: memref<512x128xbf16, #tpu.memory_space<vmem>>, %arg7: memref<1x128xf32, #tpu.memory_space<vmem>>, %arg8: memref<16x128xf32, #tpu.memory_space<vmem>>) attributes {dimension_semantics = [#tpu.dimension_semantics<parallel>], iteration_bounds = array<i64: 1>, scalar_prefetch = 0 : i64, scratch_operands = 0 : i64, tpu.core_type = #tpu.core_type<tc>, window_params = [{transform_indices = @transform_0, window_bounds = array<i64: 16, 784>}, {pipeline_mode = #tpu.pipeline_mode<synchronous>, transform_indices = @transform_1, window_bounds = array<i64: 784, 512>}, {pipeline_mode = #tpu.pipeline_mode<synchronous>, transform_indices = @transform_2, window_bounds = array<i64: 1, 512>}, {pipeline_mode = #tpu.pipeline_mode<synchronous>, transform_indices = @transform_3, window_bounds = array<i64: 512, 512>}, {pipeline_mode = #tpu.pipeline_mode<synchronous>, transform_indices = @transform_4, window_bounds = array<i64: 1, 512>}, {pipeline_mode = #tpu.pipeline_mode<synchronous>, transform_indices = @transform_5, window_bounds = array<i64: 512, 128>}, {pipeline_mode = #tpu.pipeline_mode<synchronous>, transform_indices = @transform_6, window_bounds = array<i64: 1, 128>}, {transform_indices = @transform_7, window_bounds = array<i64: 16, 128>}]} {
    %c0 = arith.constant 0 : index
    %c0_0 = arith.constant 0 : index
    %0 = vector.load %arg1[%c0, %c0_0] : memref<16x784xf32, #tpu.memory_space<vmem>>, vector<16x784xf32>
    %1 = arith.truncf %0 : vector<16x784xf32> to vector<16x784xbf16>
    %c0_1 = arith.constant 0 : index
    %c0_2 = arith.constant 0 : index
    %2 = vector.load %arg2[%c0_1, %c0_2] : memref<784x512xbf16, #tpu.memory_space<vmem>>, vector<784x512xbf16>
    %cst = arith.constant dense<0.000000e+00> : vector<16x512xf32>
    %3 = tpu.matmul %1, %2, %cst {dimension_numbers = #tpu.dot_dimension_numbers<[1], [0], [0], [1], [0, 0, 1, 1], [], []>} : vector<16x784xbf16>, vector<784x512xbf16>, vector<16x512xf32> -> vector<16x512xf32>
    %c0_3 = arith.constant 0 : index
    %c0_4 = arith.constant 0 : index
    %4 = vector.load %arg3[%c0_3, %c0_4] : memref<1x512xf32, #tpu.memory_space<vmem>>, vector<1x512xf32>
    %5 = vector.broadcast %4 : vector<1x512xf32> to vector<16x512xf32>
    %6 = arith.addf %3, %5 : vector<16x512xf32>
    %cst_5 = arith.constant 0.000000e+00 : f32
    %7 = vector.broadcast %cst_5 : f32 to vector<16x512xf32>
    %8 = arith.maximumf %6, %7 : vector<16x512xf32>
    %9 = arith.truncf %8 : vector<16x512xf32> to vector<16x512xbf16>
    %c0_6 = arith.constant 0 : index
    %c0_7 = arith.constant 0 : index
    %10 = vector.load %arg4[%c0_6, %c0_7] : memref<512x512xbf16, #tpu.memory_space<vmem>>, vector<512x512xbf16>
    %cst_8 = arith.constant dense<0.000000e+00> : vector<16x512xf32>
    %11 = tpu.matmul %9, %10, %cst_8 {dimension_numbers = #tpu.dot_dimension_numbers<[1], [0], [0], [1], [0, 0, 1, 1], [], []>} : vector<16x512xbf16>, vector<512x512xbf16>, vector<16x512xf32> -> vector<16x512xf32>
    %c0_9 = arith.constant 0 : index
    %c0_10 = arith.constant 0 : index
    %12 = vector.load %arg5[%c0_9, %c0_10] : memref<1x512xf32, #tpu.memory_space<vmem>>, vector<1x512xf32>
    %13 = vector.broadcast %12 : vector<1x512xf32> to vector<16x512xf32>
    %14 = arith.addf %11, %13 : vector<16x512xf32>
    %cst_11 = arith.constant 0.000000e+00 : f32
    %15 = vector.broadcast %cst_11 : f32 to vector<16x512xf32>
    %16 = arith.maximumf %14, %15 : vector<16x512xf32>
    %17 = arith.truncf %16 : vector<16x512xf32> to vector<16x512xbf16>
    %c0_12 = arith.constant 0 : index
    %c0_13 = arith.constant 0 : index
    %18 = vector.load %arg6[%c0_12, %c0_13] : memref<512x128xbf16, #tpu.memory_space<vmem>>, vector<512x128xbf16>
    %cst_14 = arith.constant dense<0.000000e+00> : vector<16x128xf32>
    %19 = tpu.matmul %17, %18, %cst_14 {dimension_numbers = #tpu.dot_dimension_numbers<[1], [0], [0], [1], [0, 0, 1, 1], [], []>} : vector<16x512xbf16>, vector<512x128xbf16>, vector<16x128xf32> -> vector<16x128xf32>
    %c0_15 = arith.constant 0 : index
    %c0_16 = arith.constant 0 : index
    %20 = vector.load %arg7[%c0_15, %c0_16] : memref<1x128xf32, #tpu.memory_space<vmem>>, vector<1x128xf32>
    %21 = vector.broadcast %20 : vector<1x128xf32> to vector<16x128xf32>
    %22 = arith.addf %19, %21 : vector<16x128xf32>
    %c0_17 = arith.constant 0 : index
    %c0_18 = arith.constant 0 : index
    %23 = vector.load %arg8[%c0_17, %c0_18] : memref<16x128xf32, #tpu.memory_space<vmem>>, vector<16x128xf32>
    tpu.vector_store %arg8[%c0_17, %c0_18], %22 {strides = array<i32>} : memref<16x128xf32, #tpu.memory_space<vmem>>, vector<16x128xf32>,
    return
  }
  func.func @transform_0(%arg0: i32) -> (i32, i32) {
    %c0_i32 = arith.constant 0 : i32
    %c0_i32_0 = arith.constant 0 : i32
    return %arg0, %c0_i32 : i32, i32
  }
  func.func @transform_1(%arg0: i32) -> (i32, i32) {
    %c0_i32 = arith.constant 0 : i32
    %c0_i32_0 = arith.constant 0 : i32
    %c0_i32_1 = arith.constant 0 : i32
    return %c0_i32, %c0_i32_0 : i32, i32
  }
  func.func @transform_2(%arg0: i32) -> (i32, i32) {
    %c0_i32 = arith.constant 0 : i32
    %c0_i32_0 = arith.constant 0 : i32
    %c0_i32_1 = arith.constant 0 : i32
    return %c0_i32, %c0_i32_0 : i32, i32
  }
  func.func @transform_3(%arg0: i32) -> (i32, i32) {
    %c0_i32 = arith.constant 0 : i32
    %c0_i32_0 = arith.constant 0 : i32
    %c0_i32_1 = arith.constant 0 : i32
    return %c0_i32, %c0_i32_0 : i32, i32
  }
  func.func @transform_4(%arg0: i32) -> (i32, i32) {
    %c0_i32 = arith.constant 0 : i32
    %c0_i32_0 = arith.constant 0 : i32
    %c0_i32_1 = arith.constant 0 : i32
    return %c0_i32, %c0_i32_0 : i32, i32
  }
  func.func @transform_5(%arg0: i32) -> (i32, i32) {
    %c0_i32 = arith.constant 0 : i32
    %c0_i32_0 = arith.constant 0 : i32
    %c0_i32_1 = arith.constant 0 : i32
    return %c0_i32, %c0_i32_0 : i32, i32
  }
  func.func @transform_6(%arg0: i32) -> (i32, i32) {
    %c0_i32 = arith.constant 0 : i32
    %c0_i32_0 = arith.constant 0 : i32
    %c0_i32_1 = arith.constant 0 : i32
    return %c0_i32, %c0_i32_0 : i32, i32
  }
  func.func @transform_7(%arg0: i32) -> (i32, i32) {
    %c0_i32 = arith.constant 0 : i32
    %c0_i32_0 = arith.constant 0 : i32
    return %arg0, %c0_i32 : i32, i32
  }
}

</mosaic_0001>

<llo_original>
// kernel: net2_forward.1
$region0: #{net2_forward.1}
  #allocation0 [shape = 'u32[]', space=smem, size = 0x4, offset = 0x4, fixed_abs, tag = 'smem constant byte address 0x4 - core index']
  #allocation1 [shape = 'u32[72,128]{1,0:T(1,128)}', space=vmem, size = 0x9000, scoped, tag = 'internal scratch']
  %s0 = inlined_call_operand.vmem [shape: f32[8,784], index: 0, kind: input, shape index: {}]
  %s1 = inlined_call_operand.hbm [shape: bf16[784,512], index: 1, kind: input, shape index: {}]
  %s2 = inlined_call_operand.vmem [shape: f32[1,512], index: 2, kind: input, shape index: {}]
  %s3 = inlined_call_operand.hbm [shape: bf16[512,512], index: 3, kind: input, shape index: {}]
  %s4 = inlined_call_operand.vmem [shape: f32[1,512], index: 4, kind: input, shape index: {}]
  %s5 = inlined_call_operand.vmem [shape: bf16[512,128], index: 5, kind: input, shape index: {}]
  %s6 = inlined_call_operand.vmem [shape: f32[1,128], index: 6, kind: input, shape index: {}]
  %s7 = inlined_call_operand.hbm [shape: f32[8,128], index: 7, kind: output, shape index: {}]
  %s8 = sld [smem:[#allocation0]]
  $region46: #{net2_forward.1} parent=0
    _
  %s10 = ssub.s32 1, %s8
  %s11 = scalar_select 0, %s10, %s8
  $region1: #{net2_forward.1} parent=0
    #allocation2 [shape = 'u8[802816]{0}', space=vmem, size = 0xc4000, scoped, tag = 'input window, operand 1, single buffered']
    #allocation3 [shape = 's32[1]{0}', space=sflag, size = 0x4, scoped, tag = 'scoped memory for net2_forward.1']
    #allocation4 [shape = 's32[1]{0}', space=sflag, size = 0x4, scoped, tag = 'scoped memory for net2_forward.1']
    #allocation5 [shape = 'u8[524288]{0}', space=vmem, size = 0x80000, scoped, tag = 'input window, operand 3, single buffered']
    #allocation6 [shape = 's32[1]{0}', space=sflag, size = 0x4, scoped, tag = 'scoped memory for net2_forward.1']
    #allocation7 [shape = 'u8[8192]{0}', space=vmem, size = 0x2000, scoped, tag = 'output window, operand 0, single buffered']
    %12 = vsyncpa [#allocation3], 0
    %13 = vsyncpa [#allocation6], 0
    %14 = vsyncpa [#allocation4], 0
    // Predicated region
    $region2: #{net2_forward.1} parent=1 // pred_check
      _
    $region3: #{net2_forward.1} parent=1 // pred_check_branch
      %16 = sbr.rel (0) target = $region5
    $region4: #{net2_forward.1} parent=1 // pred_region
      _
    $region5: #{net2_forward.1} parent=1 // pred_fallthru
      _
    // Predicated region
    $region6: #{net2_forward.1} parent=1 // pred_check
      _
    $region7: #{net2_forward.1} parent=1 // pred_check_branch
      %18 = sbr.rel (0) target = $region9
    $region8: #{net2_forward.1} parent=1 // pred_region
      %20 = vsyncadd [#allocation3], 0
      %s21 = sshll.u32 %s1, 4
      %s22 = int_to_ptr.hbm [resolvable:$true] %s21
      %s23 = sshll.u32 [#allocation2], 4
      %s24 = int_to_ptr.vmem [resolvable:$true] %s23
      %29 = dma.hbm_to_vmem [thread:$0]  %s22, 25088, %s24, [#allocation3], 256, 256, 16
    $region9: #{net2_forward.1} parent=1 // pred_fallthru
      _
    // Predicated region
    $region10: #{net2_forward.1} parent=1 // pred_check
      _
    $region11: #{net2_forward.1} parent=1 // pred_check_branch
      %31 = sbr.rel (0) target = $region13
    $region12: #{net2_forward.1} parent=1 // pred_region
      _
    $region13: #{net2_forward.1} parent=1 // pred_fallthru
      _
    // Predicated region
    $region14: #{net2_forward.1} parent=1 // pred_check
      _
    $region15: #{net2_forward.1} parent=1 // pred_check_branch
      %33 = sbr.rel (0) target = $region17
    $region16: #{net2_forward.1} parent=1 // pred_region
      %35 = vsyncadd [#allocation6], 0
      %s36 = sshll.u32 %s3, 4
      %s37 = int_to_ptr.hbm [resolvable:$true] %s36
      %s38 = sshll.u32 [#allocation5], 4
      %s39 = int_to_ptr.vmem [resolvable:$true] %s38
      %44 = dma.hbm_to_vmem [thread:$0]  %s37, 16384, %s39, [#allocation6], 256, 256, 16
    $region17: #{net2_forward.1} parent=1 // pred_fallthru
      _
    // Predicated region
    $region18: #{net2_forward.1} parent=1 // pred_check
      _
    $region19: #{net2_forward.1} parent=1 // pred_check_branch
      %46 = sbr.rel (0) target = $region21
    $region20: #{net2_forward.1} parent=1 // pred_region
      _
    $region21: #{net2_forward.1} parent=1 // pred_fallthru
      _
    // Predicated region
    $region22: #{net2_forward.1} parent=1 // pred_check
      _
    $region23: #{net2_forward.1} parent=1 // pred_check_branch
      %48 = sbr.rel (0) target = $region25
    $region24: #{net2_forward.1} parent=1 // pred_region
      _
    $region25: #{net2_forward.1} parent=1 // pred_fallthru
      _
    // Predicated region
    $region26: #{net2_forward.1} parent=1 // pred_check
      _
    $region27: #{net2_forward.1} parent=1 // pred_check_branch
      %50 = sbr.rel (0) target = $region29
    $region28: #{net2_forward.1} parent=1 // pred_region
      _
    $region29: #{net2_forward.1} parent=1 // pred_fallthru
      _
    // Predicated region
    $region30: #{net2_forward.1} parent=1 // pred_check
      _
    $region31: #{net2_forward.1} parent=1 // pred_check_branch
      %52 = sbr.rel (0) target = $region33
    $region32: #{net2_forward.1} parent=1 // pred_region
      %54 = dma.done [#allocation3], 25088
    $region33: #{net2_forward.1} parent=1 // pred_fallthru
      _
    // Predicated region
    $region34: #{net2_forward.1} parent=1 // pred_check
      _
    $region35: #{net2_forward.1} parent=1 // pred_check_branch
      %56 = sbr.rel (0) target = $region37
    $region36: #{net2_forward.1} parent=1 // pred_region
      %58 = dma.done [#allocation6], 16384
    $region37: #{net2_forward.1} parent=1 // pred_fallthru
      _
    %v60 = vld [vmem:[%s0] sm:$0xff]
    %v61 = vld [vmem:[%s0 + $0x8] sm:$0xff]
    %v62 = vld [vmem:[%s0 + $0x10] sm:$0xff]
    %v63 = vld [vmem:[%s0 + $0x18] sm:$0xff]
    %v64 = vld [vmem:[%s0 + $0x20] sm:$0xff]
    %v65 = vld [vmem:[%s0 + $0x28] sm:$0xff]
    %v66 = vld [vmem:[%s0 + $0x30] sm:$0xff]
    %v67 = vld [vmem:[%s0 + $0x38] sm:$0xff]
    %v68 = vld [vmem:[%s0 + $0x40] sm:$0xff]
    %v69 = vld [vmem:[%s0 + $0x48] sm:$0xff]
    %v70 = vld [vmem:[%s0 + $0x50] sm:$0xff]
    %v71 = vld [vmem:[%s0 + $0x58] sm:$0xff]
    %v72 = vld [vmem:[%s0 + $0x60] sm:$0xff]
    %v73 = vld [vmem:[%s0 + $0x68] sm:$0xff]
    %v74 = vpack.c.bf16 %v67, %v60
    %v75 = vpack.c.bf16 %v68, %v61
    %v76 = vpack.c.bf16 %v69, %v62
    %v77 = vpack.c.bf16 %v70, %v63
    %v78 = vpack.c.bf16 %v71, %v64
    %v79 = vpack.c.bf16 %v72, %v65
    %v80 = vpack.c.bf16 %v73, %v66
    %v81 = vld [vmem:[#allocation2] sm:$0xff]
    %v82 = vld [vmem:[#allocation2 + $0x8] sm:$0xff]
    %v83 = vld [vmem:[#allocation2 + $0x10] sm:$0xff]
    %v84 = vld [vmem:[#allocation2 + $0x18] sm:$0xff]
    %v85 = vld [vmem:[#allocation2 + $0x20] sm:$0xff]
    %v86 = vld [vmem:[#allocation2 + $0x28] sm:$0xff]
    %v87 = vld [vmem:[#allocation2 + $0x30] sm:$0xff]
    %v88 = vld [vmem:[#allocation2 + $0x38] sm:$0xff]
    %v89 = vld [vmem:[#allocation2 + $0x40] sm:$0xff]
    %v90 = vld [vmem:[#allocation2 + $0x48] sm:$0xff]
    %v91 = vld [vmem:[#allocation2 + $0x50] sm:$0xff]
    %v92 = vld [vmem:[#allocation2 + $0x58] sm:$0xff]
    %v93 = vld [vmem:[#allocation2 + $0x60] sm:$0xff]
    %v94 = vld [vmem:[#allocation2 + $0x68] sm:$0xff]
    %v95 = vld [vmem:[#allocation2 + $0x70] sm:$0xff]
    %v96 = vld [vmem:[#allocation2 + $0x78] sm:$0xff]
    %v97 = vld [vmem:[#allocation2 + $0x80] sm:$0xff]
    %v98 = vld [vmem:[#allocation2 + $0x88] sm:$0xff]
    %v99 = vld [vmem:[#allocation2 + $0x90] sm:$0xff]
    %v100 = vld [vmem:[#allocation2 + $0x98] sm:$0xff]
    %v101 = vld [vmem:[#allocation2 + $0xa0] sm:$0xff]
    %v102 = vld [vmem:[#allocation2 + $0xa8] sm:$0xff]
    %v103 = vld [vmem:[#allocation2 + $0xb0] sm:$0xff]
    %v104 = vld [vmem:[#allocation2 + $0xb8] sm:$0xff]
    %v105 = vld [vmem:[#allocation2 + $0xc0] sm:$0xff]
    %v106 = vld [vmem:[#allocation2 + $0xc8] sm:$0xff]
    %v107 = vld [vmem:[#allocation2 + $0xd0] sm:$0xff]
    %v108 = vld [vmem:[#allocation2 + $0xd8] sm:$0xff]
    %v109 = vld [vmem:[#allocation2 + $0xe0] sm:$0xff]
    %v110 = vld [vmem:[#allocation2 + $0xe8] sm:$0xff]
    %v111 = vld [vmem:[#allocation2 + $0xf0] sm:$0xff]
    %v112 = vld [vmem:[#allocation2 + $0xf8] sm:$0xff]
    %v113 = vld [vmem:[#allocation2 + $0x100] sm:$0xff]
    %v114 = vld [vmem:[#allocation2 + $0x108] sm:$0xff]
    %v115 = vld [vmem:[#allocation2 + $0x110] sm:$0xff]
    %v116 = vld [vmem:[#allocation2 + $0x118] sm:$0xff]
    %v117 = vld [vmem:[#allocation2 + $0x120] sm:$0xff]
    %v118 = vld [vmem:[#allocation2 + $0x128] sm:$0xff]
    %v119 = vld [vmem:[#allocation2 + $0x130] sm:$0xff]
    %v120 = vld [vmem:[#allocation2 + $0x138] sm:$0xff]
    %v121 = vld [vmem:[#allocation2 + $0x140] sm:$0xff]
    %v122 = vld [vmem:[#allocation2 + $0x148] sm:$0xff]
    %v123 = vld [vmem:[#allocation2 + $0x150] sm:$0xff]
    %v124 = vld [vmem:[#allocation2 + $0x158] sm:$0xff]
    %v125 = vld [vmem:[#allocation2 + $0x160] sm:$0xff]
    %v126 = vld [vmem:[#allocation2 + $0x168] sm:$0xff]
    %v127 = vld [vmem:[#allocation2 + $0x170] sm:$0xff]
    %v128 = vld [vmem:[#allocation2 + $0x178] sm:$0xff]
    %v129 = vld [vmem:[#allocation2 + $0x180] sm:$0xff]
    %v130 = vld [vmem:[#allocation2 + $0x188] sm:$0xff]
    %v131 = vld [vmem:[#allocation2 + $0x190] sm:$0xff]
    %v132 = vld [vmem:[#allocation2 + $0x198] sm:$0xff]
    %v133 = vld [vmem:[#allocation2 + $0x1a0] sm:$0xff]
    %v134 = vld [vmem:[#allocation2 + $0x1a8] sm:$0xff]
    %v135 = vld [vmem:[#allocation2 + $0x1b0] sm:$0xff]
    %v136 = vld [vmem:[#allocation2 + $0x1b8] sm:$0xff]
    %v137 = vld [vmem:[#allocation2 + $0x1c0] sm:$0xff]
    %v138 = vld [vmem:[#allocation2 + $0x1c8] sm:$0xff]
    %v139 = vld [vmem:[#allocation2 + $0x1d0] sm:$0xff]
    %v140 = vld [vmem:[#allocation2 + $0x1d8] sm:$0xff]
    %v141 = vld [vmem:[#allocation2 + $0x1e0] sm:$0xff]
    %v142 = vld [vmem:[#allocation2 + $0x1e8] sm:$0xff]
    %v143 = vld [vmem:[#allocation2 + $0x1f0] sm:$0xff]
    %v144 = vld [vmem:[#allocation2 + $0x1f8] sm:$0xff]
    %v145 = vld [vmem:[#allocation2 + $0x200] sm:$0xff]
    %v146 = vld [vmem:[#allocation2 + $0x208] sm:$0xff]
    %v147 = vld [vmem:[#allocation2 + $0x210] sm:$0xff]
    %v148 = vld [vmem:[#allocation2 + $0x218] sm:$0xff]
    %v149 = vld [vmem:[#allocation2 + $0x220] sm:$0xff]
    %v150 = vld [vmem:[#allocation2 + $0x228] sm:$0xff]
    %v151 = vld [vmem:[#allocation2 + $0x230] sm:$0xff]
    %v152 = vld [vmem:[#allocation2 + $0x238] sm:$0xff]
    %v153 = vld [vmem:[#allocation2 + $0x240] sm:$0xff]
    %v154 = vld [vmem:[#allocation2 + $0x248] sm:$0xff]
    %v155 = vld [vmem:[#allocation2 + $0x250] sm:$0xff]
    %v156 = vld [vmem:[#allocation2 + $0x258] sm:$0xff]
    %v157 = vld [vmem:[#allocation2 + $0x260] sm:$0xff]
    %v158 = vld [vmem:[#allocation2 + $0x268] sm:$0xff]
    %v159 = vld [vmem:[#allocation2 + $0x270] sm:$0xff]
    %v160 = vld [vmem:[#allocation2 + $0x278] sm:$0xff]
    %v161 = vld [vmem:[#allocation2 + $0x280] sm:$0xff]
    %v162 = vld [vmem:[#allocation2 + $0x288] sm:$0xff]
    %v163 = vld [vmem:[#allocation2 + $0x290] sm:$0xff]
    %v164 = vld [vmem:[#allocation2 + $0x298] sm:$0xff]
    %v165 = vld [vmem:[#allocation2 + $0x2a0] sm:$0xff]
    %v166 = vld [vmem:[#allocation2 + $0x2a8] sm:$0xff]
    %v167 = vld [vmem:[#allocation2 + $0x2b0] sm:$0xff]
    %v168 = vld [vmem:[#allocation2 + $0x2b8] sm:$0xff]
    %v169 = vld [vmem:[#allocation2 + $0x2c0] sm:$0xff]
    %v170 = vld [vmem:[#allocation2 + $0x2c8] sm:$0xff]
    %v171 = vld [vmem:[#allocation2 + $0x2d0] sm:$0xff]
    %v172 = vld [vmem:[#allocation2 + $0x2d8] sm:$0xff]
    %v173 = vld [vmem:[#allocation2 + $0x2e0] sm:$0xff]
    %v174 = vld [vmem:[#allocation2 + $0x2e8] sm:$0xff]
    %v175 = vld [vmem:[#allocation2 + $0x2f0] sm:$0xff]
    %v176 = vld [vmem:[#allocation2 + $0x2f8] sm:$0xff]
    %v177 = vld [vmem:[#allocation2 + $0x300] sm:$0xff]
    %v178 = vld [vmem:[#allocation2 + $0x308] sm:$0xff]
    %v179 = vld [vmem:[#allocation2 + $0x310] sm:$0xff]
    %v180 = vld [vmem:[#allocation2 + $0x318] sm:$0xff]
    %v181 = vld [vmem:[#allocation2 + $0x320] sm:$0xff]
    %v182 = vld [vmem:[#allocation2 + $0x328] sm:$0xff]
    %v183 = vld [vmem:[#allocation2 + $0x330] sm:$0xff]
    %v184 = vld [vmem:[#allocation2 + $0x338] sm:$0xff]
    %v185 = vld [vmem:[#allocation2 + $0x340] sm:$0xff]
    %v186 = vld [vmem:[#allocation2 + $0x348] sm:$0xff]
    %v187 = vld [vmem:[#allocation2 + $0x350] sm:$0xff]
    %v188 = vld [vmem:[#allocation2 + $0x358] sm:$0xff]
    %v189 = vld [vmem:[#allocation2 + $0x360] sm:$0xff]
    %v190 = vld [vmem:[#allocation2 + $0x368] sm:$0xff]
    %v191 = vld [vmem:[#allocation2 + $0x370] sm:$0xff]
    %v192 = vld [vmem:[#allocation2 + $0x378] sm:$0xff]
    %v193 = vld [vmem:[#allocation2 + $0x380] sm:$0xff]
    %v194 = vld [vmem:[#allocation2 + $0x388] sm:$0xff]
    %v195 = vld [vmem:[#allocation2 + $0x390] sm:$0xff]
    %v196 = vld [vmem:[#allocation2 + $0x398] sm:$0xff]
    %v197 = vld [vmem:[#allocation2 + $0x3a0] sm:$0xff]
    %v198 = vld [vmem:[#allocation2 + $0x3a8] sm:$0xff]
    %v199 = vld [vmem:[#allocation2 + $0x3b0] sm:$0xff]
    %v200 = vld [vmem:[#allocation2 + $0x3b8] sm:$0xff]
    %v201 = vld [vmem:[#allocation2 + $0x3c0] sm:$0xff]
    %v202 = vld [vmem:[#allocation2 + $0x3c8] sm:$0xff]
    %v203 = vld [vmem:[#allocation2 + $0x3d0] sm:$0xff]
    %v204 = vld [vmem:[#allocation2 + $0x3d8] sm:$0xff]
    %v205 = vld [vmem:[#allocation2 + $0x3e0] sm:$0xff]
    %v206 = vld [vmem:[#allocation2 + $0x3e8] sm:$0xff]
    %v207 = vld [vmem:[#allocation2 + $0x3f0] sm:$0xff]
    %v208 = vld [vmem:[#allocation2 + $0x3f8] sm:$0xff]
    %v209 = vld [vmem:[#allocation2 + $0x400] sm:$0xff]
    %v210 = vld [vmem:[#allocation2 + $0x408] sm:$0xff]
    %v211 = vld [vmem:[#allocation2 + $0x410] sm:$0xff]
    %v212 = vld [vmem:[#allocation2 + $0x418] sm:$0xff]
    %v213 = vld [vmem:[#allocation2 + $0x420] sm:$0xff]
    %v214 = vld [vmem:[#allocation2 + $0x428] sm:$0xff]
    %v215 = vld [vmem:[#allocation2 + $0x430] sm:$0xff]
    %v216 = vld [vmem:[#allocation2 + $0x438] sm:$0xff]
    %v217 = vld [vmem:[#allocation2 + $0x440] sm:$0xff]
    %v218 = vld [vmem:[#allocation2 + $0x448] sm:$0xff]
    %v219 = vld [vmem:[#allocation2 + $0x450] sm:$0xff]
    %v220 = vld [vmem:[#allocation2 + $0x458] sm:$0xff]
    %v221 = vld [vmem:[#allocation2 + $0x460] sm:$0xff]
    %v222 = vld [vmem:[#allocation2 + $0x468] sm:$0xff]
    %v223 = vld [vmem:[#allocation2 + $0x470] sm:$0xff]
    %v224 = vld [vmem:[#allocation2 + $0x478] sm:$0xff]
    %v225 = vld [vmem:[#allocation2 + $0x480] sm:$0xff]
    %v226 = vld [vmem:[#allocation2 + $0x488] sm:$0xff]
    %v227 = vld [vmem:[#allocation2 + $0x490] sm:$0xff]
    %v228 = vld [vmem:[#allocation2 + $0x498] sm:$0xff]
    %v229 = vld [vmem:[#allocation2 + $0x4a0] sm:$0xff]
    %v230 = vld [vmem:[#allocation2 + $0x4a8] sm:$0xff]
    %v231 = vld [vmem:[#allocation2 + $0x4b0] sm:$0xff]
    %v232 = vld [vmem:[#allocation2 + $0x4b8] sm:$0xff]
    %v233 = vld [vmem:[#allocation2 + $0x4c0] sm:$0xff]
    %v234 = vld [vmem:[#allocation2 + $0x4c8] sm:$0xff]
    %v235 = vld [vmem:[#allocation2 + $0x4d0] sm:$0xff]
    %v236 = vld [vmem:[#allocation2 + $0x4d8] sm:$0xff]
    %v237 = vld [vmem:[#allocation2 + $0x4e0] sm:$0xff]
    %v238 = vld [vmem:[#allocation2 + $0x4e8] sm:$0xff]
    %v239 = vld [vmem:[#allocation2 + $0x4f0] sm:$0xff]
    %v240 = vld [vmem:[#allocation2 + $0x4f8] sm:$0xff]
    %v241 = vld [vmem:[#allocation2 + $0x500] sm:$0xff]
    %v242 = vld [vmem:[#allocation2 + $0x508] sm:$0xff]
    %v243 = vld [vmem:[#allocation2 + $0x510] sm:$0xff]
    %v244 = vld [vmem:[#allocation2 + $0x518] sm:$0xff]
    %v245 = vld [vmem:[#allocation2 + $0x520] sm:$0xff]
    %v246 = vld [vmem:[#allocation2 + $0x528] sm:$0xff]
    %v247 = vld [vmem:[#allocation2 + $0x530] sm:$0xff]
    %v248 = vld [vmem:[#allocation2 + $0x538] sm:$0xff]
    %v249 = vld [vmem:[#allocation2 + $0x540] sm:$0xff]
    %v250 = vld [vmem:[#allocation2 + $0x548] sm:$0xff]
    %v251 = vld [vmem:[#allocation2 + $0x550] sm:$0xff]
    %v252 = vld [vmem:[#allocation2 + $0x558] sm:$0xff]
    %v253 = vld [vmem:[#allocation2 + $0x560] sm:$0xff]
    %v254 = vld [vmem:[#allocation2 + $0x568] sm:$0xff]
    %v255 = vld [vmem:[#allocation2 + $0x570] sm:$0xff]
    %v256 = vld [vmem:[#allocation2 + $0x578] sm:$0xff]
    %v257 = vld [vmem:[#allocation2 + $0x580] sm:$0xff]
    %v258 = vld [vmem:[#allocation2 + $0x588] sm:$0xff]
    %v259 = vld [vmem:[#allocation2 + $0x590] sm:$0xff]
    %v260 = vld [vmem:[#allocation2 + $0x598] sm:$0xff]
    %v261 = vld [vmem:[#allocation2 + $0x5a0] sm:$0xff]
    %v262 = vld [vmem:[#allocation2 + $0x5a8] sm:$0xff]
    %v263 = vld [vmem:[#allocation2 + $0x5b0] sm:$0xff]
    %v264 = vld [vmem:[#allocation2 + $0x5b8] sm:$0xff]
    %v265 = vld [vmem:[#allocation2 + $0x5c0] sm:$0xff]
    %v266 = vld [vmem:[#allocation2 + $0x5c8] sm:$0xff]
    %v267 = vld [vmem:[#allocation2 + $0x5d0] sm:$0xff]
    %v268 = vld [vmem:[#allocation2 + $0x5d8] sm:$0xff]
    %v269 = vld [vmem:[#allocation2 + $0x5e0] sm:$0xff]
    %v270 = vld [vmem:[#allocation2 + $0x5e8] sm:$0xff]
    %v271 = vld [vmem:[#allocation2 + $0x5f0] sm:$0xff]
    %v272 = vld [vmem:[#allocation2 + $0x5f8] sm:$0xff]
    %v273 = vld [vmem:[#allocation2 + $0x600] sm:$0xff]
    %v274 = vld [vmem:[#allocation2 + $0x608] sm:$0xff]
    %v275 = vld [vmem:[#allocation2 + $0x610] sm:$0xff]
    %v276 = vld [vmem:[#allocation2 + $0x618] sm:$0xff]
    %v277 = vld [vmem:[%s2] sm:$0xf]
    %v279 = vperm.slane %v277, 0
    %v280 = vperm.slane %v277, 1
    %v281 = vperm.slane %v277, 2
    %v282 = vperm.slane %v277, 3
    %v483 = vunpack.c.l.b16 %v81
    %v484 = vunpack.c.h.b16 %v81
    %v485 = vunpack.c.l.b16 %v82
    %v486 = vunpack.c.h.b16 %v82
    %v487 = vunpack.c.l.b16 %v83
    %v488 = vunpack.c.h.b16 %v83
    %v489 = vunpack.c.l.b16 %v84
    %v490 = vunpack.c.h.b16 %v84
    %v491 = vunpack.c.l.b16 %v85
    %v492 = vunpack.c.h.b16 %v85
    %v493 = vunpack.c.l.b16 %v86
    %v494 = vunpack.c.h.b16 %v86
    %v495 = vunpack.c.l.b16 %v87
    %v496 = vunpack.c.h.b16 %v87
    %v497 = vunpack.c.l.b16 %v88
    %v498 = vunpack.c.h.b16 %v88
    %v499 = vunpack.c.l.b16 %v89
    %v500 = vunpack.c.h.b16 %v89
    %v501 = vunpack.c.l.b16 %v90
    %v502 = vunpack.c.h.b16 %v90
    %v503 = vunpack.c.l.b16 %v91
    %v504 = vunpack.c.h.b16 %v91
    %v505 = vunpack.c.l.b16 %v92
    %v506 = vunpack.c.h.b16 %v92
    %v507 = vunpack.c.l.b16 %v93
    %v508 = vunpack.c.h.b16 %v93
    %v509 = vunpack.c.l.b16 %v94
    %v510 = vunpack.c.h.b16 %v94
    %v511 = vunpack.c.l.b16 %v95
    %v512 = vunpack.c.h.b16 %v95
    %v513 = vunpack.c.l.b16 %v96
    %v514 = vunpack.c.h.b16 %v96
    %v515 = vunpack.c.l.b16 %v97
    %v516 = vunpack.c.h.b16 %v97
    %v517 = vunpack.c.l.b16 %v98
    %v518 = vunpack.c.h.b16 %v98
    %v519 = vunpack.c.l.b16 %v99
    %v520 = vunpack.c.h.b16 %v99
    %v521 = vunpack.c.l.b16 %v100
    %v522 = vunpack.c.h.b16 %v100
    %v523 = vunpack.c.l.b16 %v101
    %v524 = vunpack.c.h.b16 %v101
    %v525 = vunpack.c.l.b16 %v102
    %v526 = vunpack.c.h.b16 %v102
    %v527 = vunpack.c.l.b16 %v103
    %v528 = vunpack.c.h.b16 %v103
    %v529 = vunpack.c.l.b16 %v104
    %v530 = vunpack.c.h.b16 %v104
    %v531 = vunpack.c.l.b16 %v105
    %v532 = vunpack.c.h.b16 %v105
    %v533 = vunpack.c.l.b16 %v106
    %v534 = vunpack.c.h.b16 %v106
    %v535 = vunpack.c.l.b16 %v107
    %v536 = vunpack.c.h.b16 %v107
    %v537 = vunpack.c.l.b16 %v108
    %v538 = vunpack.c.h.b16 %v108
    %v539 = vunpack.c.l.b16 %v109
    %v540 = vunpack.c.h.b16 %v109
    %v541 = vunpack.c.l.b16 %v110
    %v542 = vunpack.c.h.b16 %v110
    %v543 = vunpack.c.l.b16 %v111
    %v544 = vunpack.c.h.b16 %v111
    %v545 = vunpack.c.l.b16 %v112
    %v546 = vunpack.c.h.b16 %v112
    %v547 = vunpack.c.l.b16 %v113
    %v548 = vunpack.c.h.b16 %v113
    %v549 = vunpack.c.l.b16 %v114
    %v550 = vunpack.c.h.b16 %v114
    %v551 = vunpack.c.l.b16 %v115
    %v552 = vunpack.c.h.b16 %v115
    %v553 = vunpack.c.l.b16 %v116
    %v554 = vunpack.c.h.b16 %v116
    %v555 = vunpack.c.l.b16 %v117
    %v556 = vunpack.c.h.b16 %v117
    %v557 = vunpack.c.l.b16 %v118
    %v558 = vunpack.c.h.b16 %v118
    %v559 = vunpack.c.l.b16 %v119
    %v560 = vunpack.c.h.b16 %v119
    %v561 = vunpack.c.l.b16 %v120
    %v562 = vunpack.c.h.b16 %v120
    %v563 = vunpack.c.l.b16 %v121
    %v564 = vunpack.c.h.b16 %v121
    %v565 = vunpack.c.l.b16 %v122
    %v566 = vunpack.c.h.b16 %v122
    %v567 = vunpack.c.l.b16 %v123
    %v568 = vunpack.c.h.b16 %v123
    %v569 = vunpack.c.l.b16 %v124
    %v570 = vunpack.c.h.b16 %v124
    %v571 = vunpack.c.l.b16 %v125
    %v572 = vunpack.c.h.b16 %v125
    %v573 = vunpack.c.l.b16 %v126
    %v574 = vunpack.c.h.b16 %v126
    %v575 = vunpack.c.l.b16 %v127
    %v576 = vunpack.c.h.b16 %v127
    %v577 = vunpack.c.l.b16 %v128
    %v578 = vunpack.c.h.b16 %v128
    %v579 = vunpack.c.l.b16 %v129
    %v580 = vunpack.c.h.b16 %v129
    %v581 = vunpack.c.l.b16 %v130
    %v582 = vunpack.c.h.b16 %v130
    %v583 = vunpack.c.l.b16 %v131
    %v584 = vunpack.c.h.b16 %v131
    %v585 = vunpack.c.l.b16 %v132
    %v586 = vunpack.c.h.b16 %v132
    %v587 = vunpack.c.l.b16 %v133
    %v588 = vunpack.c.h.b16 %v133
    %v589 = vunpack.c.l.b16 %v134
    %v590 = vunpack.c.h.b16 %v134
    %v591 = vunpack.c.l.b16 %v135
    %v592 = vunpack.c.h.b16 %v135
    %v593 = vunpack.c.l.b16 %v136
    %v594 = vunpack.c.h.b16 %v136
    %v595 = vunpack.c.l.b16 %v137
    %v596 = vunpack.c.h.b16 %v137
    %v597 = vunpack.c.l.b16 %v138
    %v598 = vunpack.c.h.b16 %v138
    %v599 = vunpack.c.l.b16 %v139
    %v600 = vunpack.c.h.b16 %v139
    %v601 = vunpack.c.l.b16 %v140
    %v602 = vunpack.c.h.b16 %v140
    %v603 = vunpack.c.l.b16 %v141
    %v604 = vunpack.c.h.b16 %v141
    %v605 = vunpack.c.l.b16 %v142
    %v606 = vunpack.c.h.b16 %v142
    %v607 = vunpack.c.l.b16 %v143
    %v608 = vunpack.c.h.b16 %v143
    %v609 = vunpack.c.l.b16 %v144
    %v610 = vunpack.c.h.b16 %v144
    %v611 = vunpack.c.l.b16 %v145
    %v612 = vunpack.c.h.b16 %v145
    %v613 = vunpack.c.l.b16 %v146
    %v614 = vunpack.c.h.b16 %v146
    %v615 = vunpack.c.l.b16 %v147
    %v616 = vunpack.c.h.b16 %v147
    %v617 = vunpack.c.l.b16 %v148
    %v618 = vunpack.c.h.b16 %v148
    %v619 = vunpack.c.l.b16 %v149
    %v620 = vunpack.c.h.b16 %v149
    %v621 = vunpack.c.l.b16 %v150
    %v622 = vunpack.c.h.b16 %v150
    %v623 = vunpack.c.l.b16 %v151
    %v624 = vunpack.c.h.b16 %v151
    %v625 = vunpack.c.l.b16 %v152
    %v626 = vunpack.c.h.b16 %v152
    %v627 = vunpack.c.l.b16 %v153
    %v628 = vunpack.c.h.b16 %v153
    %v629 = vunpack.c.l.b16 %v154
    %v630 = vunpack.c.h.b16 %v154
    %v631 = vunpack.c.l.b16 %v155
    %v632 = vunpack.c.h.b16 %v155
    %v633 = vunpack.c.l.b16 %v156
    %v634 = vunpack.c.h.b16 %v156
    %v635 = vunpack.c.l.b16 %v157
    %v636 = vunpack.c.h.b16 %v157
    %v637 = vunpack.c.l.b16 %v158
    %v638 = vunpack.c.h.b16 %v158
    %v639 = vunpack.c.l.b16 %v159
    %v640 = vunpack.c.h.b16 %v159
    %v641 = vunpack.c.l.b16 %v160
    %v642 = vunpack.c.h.b16 %v160
    %v643 = vunpack.c.l.b16 %v161
    %v644 = vunpack.c.h.b16 %v161
    %v645 = vunpack.c.l.b16 %v162
    %v646 = vunpack.c.h.b16 %v162
    %v647 = vunpack.c.l.b16 %v163
    %v648 = vunpack.c.h.b16 %v163
    %v649 = vunpack.c.l.b16 %v164
    %v650 = vunpack.c.h.b16 %v164
    %v651 = vunpack.c.l.b16 %v165
    %v652 = vunpack.c.h.b16 %v165
    %v653 = vunpack.c.l.b16 %v166
    %v654 = vunpack.c.h.b16 %v166
    %v655 = vunpack.c.l.b16 %v167
    %v656 = vunpack.c.h.b16 %v167
    %v657 = vunpack.c.l.b16 %v168
    %v658 = vunpack.c.h.b16 %v168
    %v659 = vunpack.c.l.b16 %v169
    %v660 = vunpack.c.h.b16 %v169
    %v661 = vunpack.c.l.b16 %v170
    %v662 = vunpack.c.h.b16 %v170
    %v663 = vunpack.c.l.b16 %v171
    %v664 = vunpack.c.h.b16 %v171
    %v665 = vunpack.c.l.b16 %v172
    %v666 = vunpack.c.h.b16 %v172
    %v667 = vunpack.c.l.b16 %v173
    %v668 = vunpack.c.h.b16 %v173
    %v669 = vunpack.c.l.b16 %v174
    %v670 = vunpack.c.h.b16 %v174
    %v671 = vunpack.c.l.b16 %v175
    %v672 = vunpack.c.h.b16 %v175
    %v673 = vunpack.c.l.b16 %v176
    %v674 = vunpack.c.h.b16 %v176
    %v675 = vunpack.c.l.b16 %v177
    %v676 = vunpack.c.h.b16 %v177
    %v677 = vunpack.c.l.b16 %v178
    %v678 = vunpack.c.h.b16 %v178
    %v679 = vunpack.c.l.b16 %v179
    %v680 = vunpack.c.h.b16 %v179
    %v681 = vunpack.c.l.b16 %v180
    %v682 = vunpack.c.h.b16 %v180
    %v683 = vunpack.c.l.b16 %v181
    %v684 = vunpack.c.h.b16 %v181
    %v685 = vunpack.c.l.b16 %v182
    %v686 = vunpack.c.h.b16 %v182
    %v687 = vunpack.c.l.b16 %v183
    %v688 = vunpack.c.h.b16 %v183
    %v689 = vunpack.c.l.b16 %v184
    %v690 = vunpack.c.h.b16 %v184
    %v691 = vunpack.c.l.b16 %v185
    %v692 = vunpack.c.h.b16 %v185
    %v693 = vunpack.c.l.b16 %v186
    %v694 = vunpack.c.h.b16 %v186
    %v695 = vunpack.c.l.b16 %v187
    %v696 = vunpack.c.h.b16 %v187
    %v697 = vunpack.c.l.b16 %v188
    %v698 = vunpack.c.h.b16 %v188
    %v699 = vunpack.c.l.b16 %v189
    %v700 = vunpack.c.h.b16 %v189
    %v701 = vunpack.c.l.b16 %v190
    %v702 = vunpack.c.h.b16 %v190
    %v703 = vunpack.c.l.b16 %v191
    %v704 = vunpack.c.h.b16 %v191
    %v705 = vunpack.c.l.b16 %v192
    %v706 = vunpack.c.h.b16 %v192
    %v707 = vunpack.c.l.b16 %v193
    %v708 = vunpack.c.h.b16 %v193
    %v709 = vunpack.c.l.b16 %v194
    %v710 = vunpack.c.h.b16 %v194
    %v711 = vunpack.c.l.b16 %v195
    %v712 = vunpack.c.h.b16 %v195
    %v713 = vunpack.c.l.b16 %v196
    %v714 = vunpack.c.h.b16 %v196
    %v715 = vunpack.c.l.b16 %v197
    %v716 = vunpack.c.h.b16 %v197
    %v717 = vunpack.c.l.b16 %v198
    %v718 = vunpack.c.h.b16 %v198
    %v719 = vunpack.c.l.b16 %v199
    %v720 = vunpack.c.h.b16 %v199
    %v721 = vunpack.c.l.b16 %v200
    %v722 = vunpack.c.h.b16 %v200
    %v723 = vunpack.c.l.b16 %v201
    %v724 = vunpack.c.h.b16 %v201
    %v725 = vunpack.c.l.b16 %v202
    %v726 = vunpack.c.h.b16 %v202
    %v727 = vunpack.c.l.b16 %v203
    %v728 = vunpack.c.h.b16 %v203
    %v729 = vunpack.c.l.b16 %v204
    %v730 = vunpack.c.h.b16 %v204
    %v731 = vunpack.c.l.b16 %v205
    %v732 = vunpack.c.h.b16 %v205
    %v733 = vunpack.c.l.b16 %v206
    %v734 = vunpack.c.h.b16 %v206
    %v735 = vunpack.c.l.b16 %v207
    %v736 = vunpack.c.h.b16 %v207
    %v737 = vunpack.c.l.b16 %v208
    %v738 = vunpack.c.h.b16 %v208
    %v739 = vunpack.c.l.b16 %v209
    %v740 = vunpack.c.h.b16 %v209
    %v741 = vunpack.c.l.b16 %v210
    %v742 = vunpack.c.h.b16 %v210
    %v743 = vunpack.c.l.b16 %v211
    %v744 = vunpack.c.h.b16 %v211
    %v745 = vunpack.c.l.b16 %v212
    %v746 = vunpack.c.h.b16 %v212
    %v747 = vunpack.c.l.b16 %v213
    %v748 = vunpack.c.h.b16 %v213
    %v749 = vunpack.c.l.b16 %v214
    %v750 = vunpack.c.h.b16 %v214
    %v751 = vunpack.c.l.b16 %v215
    %v752 = vunpack.c.h.b16 %v215
    %v753 = vunpack.c.l.b16 %v216
    %v754 = vunpack.c.h.b16 %v216
    %v755 = vunpack.c.l.b16 %v217
    %v756 = vunpack.c.h.b16 %v217
    %v757 = vunpack.c.l.b16 %v218
    %v758 = vunpack.c.h.b16 %v218
    %v759 = vunpack.c.l.b16 %v219
    %v760 = vunpack.c.h.b16 %v219
    %v761 = vunpack.c.l.b16 %v220
    %v762 = vunpack.c.h.b16 %v220
    %v763 = vunpack.c.l.b16 %v221
    %v764 = vunpack.c.h.b16 %v221
    %v765 = vunpack.c.l.b16 %v222
    %v766 = vunpack.c.h.b16 %v222
    %v767 = vunpack.c.l.b16 %v223
    %v768 = vunpack.c.h.b16 %v223
    %v769 = vunpack.c.l.b16 %v224
    %v770 = vunpack.c.h.b16 %v224
    %v771 = vunpack.c.l.b16 %v225
    %v772 = vunpack.c.h.b16 %v225
    %v773 = vunpack.c.l.b16 %v226
    %v774 = vunpack.c.h.b16 %v226
    %v775 = vunpack.c.l.b16 %v227
    %v776 = vunpack.c.h.b16 %v227
    %v777 = vunpack.c.l.b16 %v228
    %v778 = vunpack.c.h.b16 %v228
    %v779 = vunpack.c.l.b16 %v229
    %v780 = vunpack.c.h.b16 %v229
    %v781 = vunpack.c.l.b16 %v230
    %v782 = vunpack.c.h.b16 %v230
    %v783 = vunpack.c.l.b16 %v231
    %v784 = vunpack.c.h.b16 %v231
    %v785 = vunpack.c.l.b16 %v232
    %v786 = vunpack.c.h.b16 %v232
    %v787 = vunpack.c.l.b16 %v233
    %v788 = vunpack.c.h.b16 %v233
    %v789 = vunpack.c.l.b16 %v234
    %v790 = vunpack.c.h.b16 %v234
    %v791 = vunpack.c.l.b16 %v235
    %v792 = vunpack.c.h.b16 %v235
    %v793 = vunpack.c.l.b16 %v236
    %v794 = vunpack.c.h.b16 %v236
    %v795 = vunpack.c.l.b16 %v237
    %v796 = vunpack.c.h.b16 %v237
    %v797 = vunpack.c.l.b16 %v238
    %v798 = vunpack.c.h.b16 %v238
    %v799 = vunpack.c.l.b16 %v239
    %v800 = vunpack.c.h.b16 %v239
    %v801 = vunpack.c.l.b16 %v240
    %v802 = vunpack.c.h.b16 %v240
    %v803 = vunpack.c.l.b16 %v241
    %v804 = vunpack.c.h.b16 %v241
    %v805 = vunpack.c.l.b16 %v242
    %v806 = vunpack.c.h.b16 %v242
    %v807 = vunpack.c.l.b16 %v243
    %v808 = vunpack.c.h.b16 %v243
    %v809 = vunpack.c.l.b16 %v244
    %v810 = vunpack.c.h.b16 %v244
    %v811 = vunpack.c.l.b16 %v245
    %v812 = vunpack.c.h.b16 %v245
    %v813 = vunpack.c.l.b16 %v246
    %v814 = vunpack.c.h.b16 %v246
    %v815 = vunpack.c.l.b16 %v247
    %v816 = vunpack.c.h.b16 %v247
    %v817 = vunpack.c.l.b16 %v248
    %v818 = vunpack.c.h.b16 %v248
    %v819 = vunpack.c.l.b16 %v249
    %v820 = vunpack.c.h.b16 %v249
    %v821 = vunpack.c.l.b16 %v250
    %v822 = vunpack.c.h.b16 %v250
    %v823 = vunpack.c.l.b16 %v251
    %v824 = vunpack.c.h.b16 %v251
    %v825 = vunpack.c.l.b16 %v252
    %v826 = vunpack.c.h.b16 %v252
    %v827 = vunpack.c.l.b16 %v253
    %v828 = vunpack.c.h.b16 %v253
    %v829 = vunpack.c.l.b16 %v254
    %v830 = vunpack.c.h.b16 %v254
    %v831 = vunpack.c.l.b16 %v255
    %v832 = vunpack.c.h.b16 %v255
    %v833 = vunpack.c.l.b16 %v256
    %v834 = vunpack.c.h.b16 %v256
    %v835 = vunpack.c.l.b16 %v257
    %v836 = vunpack.c.h.b16 %v257
    %v837 = vunpack.c.l.b16 %v258
    %v838 = vunpack.c.h.b16 %v258
    %v839 = vunpack.c.l.b16 %v259
    %v840 = vunpack.c.h.b16 %v259
    %v841 = vunpack.c.l.b16 %v260
    %v842 = vunpack.c.h.b16 %v260
    %v843 = vunpack.c.l.b16 %v261
    %v844 = vunpack.c.h.b16 %v261
    %v845 = vunpack.c.l.b16 %v262
    %v846 = vunpack.c.h.b16 %v262
    %v847 = vunpack.c.l.b16 %v263
    %v848 = vunpack.c.h.b16 %v263
    %v849 = vunpack.c.l.b16 %v264
    %v850 = vunpack.c.h.b16 %v264
    %v851 = vunpack.c.l.b16 %v265
    %v852 = vunpack.c.h.b16 %v265
    %v853 = vunpack.c.l.b16 %v266
    %v854 = vunpack.c.h.b16 %v266
    %v855 = vunpack.c.l.b16 %v267
    %v856 = vunpack.c.h.b16 %v267
    %v857 = vunpack.c.l.b16 %v268
    %v858 = vunpack.c.h.b16 %v268
    %v859 = vunpack.c.l.b16 %v269
    %v860 = vunpack.c.h.b16 %v269
    %v861 = vunpack.c.l.b16 %v270
    %v862 = vunpack.c.h.b16 %v270
    %v863 = vunpack.c.l.b16 %v271
    %v864 = vunpack.c.h.b16 %v271
    %v865 = vunpack.c.l.b16 %v272
    %v866 = vunpack.c.h.b16 %v272
    %v867 = vunpack.c.l.b16 %v273
    %v868 = vunpack.c.h.b16 %v273
    %v869 = vunpack.c.l.b16 %v274
    %v870 = vunpack.c.h.b16 %v274
    %v871 = vunpack.c.l.b16 %v275
    %v872 = vunpack.c.h.b16 %v275
    %v873 = vunpack.c.l.b16 %v276
    %v874 = vunpack.c.h.b16 %v276
    %v875 = vpack.c.b16 %v487, %v483
    %v876 = vpack.c.b16 %v488, %v484
    %v877 = vpack.c.b16 %v489, %v485
    %v878 = vpack.c.b16 %v490, %v486
    %v879 = vpack.c.b16 %v495, %v491
    %v880 = vpack.c.b16 %v496, %v492
    %v881 = vpack.c.b16 %v497, %v493
    %v882 = vpack.c.b16 %v498, %v494
    %v883 = vpack.c.b16 %v503, %v499
    %v884 = vpack.c.b16 %v504, %v500
    %v885 = vpack.c.b16 %v505, %v501
    %v886 = vpack.c.b16 %v506, %v502
    %v887 = vpack.c.b16 %v511, %v507
    %v888 = vpack.c.b16 %v512, %v508
    %v889 = vpack.c.b16 %v513, %v509
    %v890 = vpack.c.b16 %v514, %v510
    %v891 = vpack.c.b16 %v519, %v515
    %v892 = vpack.c.b16 %v520, %v516
    %v893 = vpack.c.b16 %v521, %v517
    %v894 = vpack.c.b16 %v522, %v518
    %v895 = vpack.c.b16 %v527, %v523
    %v896 = vpack.c.b16 %v528, %v524
    %v897 = vpack.c.b16 %v529, %v525
    %v898 = vpack.c.b16 %v530, %v526
    %v899 = vpack.c.b16 %v535, %v531
    %v900 = vpack.c.b16 %v536, %v532
    %v901 = vpack.c.b16 %v537, %v533
    %v902 = vpack.c.b16 %v538, %v534
    %v903 = vpack.c.b16 %v543, %v539
    %v904 = vpack.c.b16 %v544, %v540
    %v905 = vpack.c.b16 %v545, %v541
    %v906 = vpack.c.b16 %v546, %v542
    %v907 = vpack.c.b16 %v551, %v547
    %v908 = vpack.c.b16 %v552, %v548
    %v909 = vpack.c.b16 %v553, %v549
    %v910 = vpack.c.b16 %v554, %v550
    %v911 = vpack.c.b16 %v559, %v555
    %v912 = vpack.c.b16 %v560, %v556
    %v913 = vpack.c.b16 %v561, %v557
    %v914 = vpack.c.b16 %v562, %v558
    %v915 = vpack.c.b16 %v567, %v563
    %v916 = vpack.c.b16 %v568, %v564
    %v917 = vpack.c.b16 %v569, %v565
    %v918 = vpack.c.b16 %v570, %v566
    %v919 = vpack.c.b16 %v575, %v571
    %v920 = vpack.c.b16 %v576, %v572
    %v921 = vpack.c.b16 %v577, %v573
    %v922 = vpack.c.b16 %v578, %v574
    %v923 = vpack.c.b16 %v583, %v579
    %v924 = vpack.c.b16 %v584, %v580
    %v925 = vpack.c.b16 %v585, %v581
    %v926 = vpack.c.b16 %v586, %v582
    %v927 = vpack.c.b16 %v591, %v587
    %v928 = vpack.c.b16 %v592, %v588
    %v929 = vpack.c.b16 %v593, %v589
    %v930 = vpack.c.b16 %v594, %v590
    %v931 = vpack.c.b16 %v599, %v595
    %v932 = vpack.c.b16 %v600, %v596
    %v933 = vpack.c.b16 %v601, %v597
    %v934 = vpack.c.b16 %v602, %v598
    %v935 = vpack.c.b16 %v607, %v603
    %v936 = vpack.c.b16 %v608, %v604
    %v937 = vpack.c.b16 %v609, %v605
    %v938 = vpack.c.b16 %v610, %v606
    %v939 = vpack.c.b16 %v615, %v611
    %v940 = vpack.c.b16 %v616, %v612
    %v941 = vpack.c.b16 %v617, %v613
    %v942 = vpack.c.b16 %v618, %v614
    %v943 = vpack.c.b16 %v623, %v619
    %v944 = vpack.c.b16 %v624, %v620
    %v945 = vpack.c.b16 %v625, %v621
    %v946 = vpack.c.b16 %v626, %v622
    %v947 = vpack.c.b16 %v631, %v627
    %v948 = vpack.c.b16 %v632, %v628
    %v949 = vpack.c.b16 %v633, %v629
    %v950 = vpack.c.b16 %v634, %v630
    %v951 = vpack.c.b16 %v639, %v635
    %v952 = vpack.c.b16 %v640, %v636
    %v953 = vpack.c.b16 %v641, %v637
    %v954 = vpack.c.b16 %v642, %v638
    %v955 = vpack.c.b16 %v647, %v643
    %v956 = vpack.c.b16 %v648, %v644
    %v957 = vpack.c.b16 %v649, %v645
    %v958 = vpack.c.b16 %v650, %v646
    %v959 = vpack.c.b16 %v655, %v651
    %v960 = vpack.c.b16 %v656, %v652
    %v961 = vpack.c.b16 %v657, %v653
    %v962 = vpack.c.b16 %v658, %v654
    %v963 = vpack.c.b16 %v663, %v659
    %v964 = vpack.c.b16 %v664, %v660
    %v965 = vpack.c.b16 %v665, %v661
    %v966 = vpack.c.b16 %v666, %v662
    %v967 = vpack.c.b16 %v671, %v667
    %v968 = vpack.c.b16 %v672, %v668
    %v969 = vpack.c.b16 %v673, %v669
    %v970 = vpack.c.b16 %v674, %v670
    %v971 = vpack.c.b16 %v679, %v675
    %v972 = vpack.c.b16 %v680, %v676
    %v973 = vpack.c.b16 %v681, %v677
    %v974 = vpack.c.b16 %v682, %v678
    %v975 = vpack.c.b16 %v687, %v683
    %v976 = vpack.c.b16 %v688, %v684
    %v977 = vpack.c.b16 %v689, %v685
    %v978 = vpack.c.b16 %v690, %v686
    %v979 = vpack.c.b16 %v695, %v691
    %v980 = vpack.c.b16 %v696, %v692
    %v981 = vpack.c.b16 %v697, %v693
    %v982 = vpack.c.b16 %v698, %v694
    %v983 = vpack.c.b16 %v703, %v699
    %v984 = vpack.c.b16 %v704, %v700
    %v985 = vpack.c.b16 %v705, %v701
    %v986 = vpack.c.b16 %v706, %v702
    %v987 = vpack.c.b16 %v711, %v707
    %v988 = vpack.c.b16 %v712, %v708
    %v989 = vpack.c.b16 %v713, %v709
    %v990 = vpack.c.b16 %v714, %v710
    %v991 = vpack.c.b16 %v719, %v715
    %v992 = vpack.c.b16 %v720, %v716
    %v993 = vpack.c.b16 %v721, %v717
    %v994 = vpack.c.b16 %v722, %v718
    %v995 = vpack.c.b16 %v727, %v723
    %v996 = vpack.c.b16 %v728, %v724
    %v997 = vpack.c.b16 %v729, %v725
    %v998 = vpack.c.b16 %v730, %v726
    %v999 = vpack.c.b16 %v735, %v731
    %v1000 = vpack.c.b16 %v736, %v732
    %v1001 = vpack.c.b16 %v737, %v733
    %v1002 = vpack.c.b16 %v738, %v734
    %v1003 = vpack.c.b16 %v743, %v739
    %v1004 = vpack.c.b16 %v744, %v740
    %v1005 = vpack.c.b16 %v745, %v741
    %v1006 = vpack.c.b16 %v746, %v742
    %v1007 = vpack.c.b16 %v751, %v747
    %v1008 = vpack.c.b16 %v752, %v748
    %v1009 = vpack.c.b16 %v753, %v749
    %v1010 = vpack.c.b16 %v754, %v750
    %v1011 = vpack.c.b16 %v759, %v755
    %v1012 = vpack.c.b16 %v760, %v756
    %v1013 = vpack.c.b16 %v761, %v757
    %v1014 = vpack.c.b16 %v762, %v758
    %v1015 = vpack.c.b16 %v767, %v763
    %v1016 = vpack.c.b16 %v768, %v764
    %v1017 = vpack.c.b16 %v769, %v765
    %v1018 = vpack.c.b16 %v770, %v766
    %v1019 = vpack.c.b16 %v775, %v771
    %v1020 = vpack.c.b16 %v776, %v772
    %v1021 = vpack.c.b16 %v777, %v773
    %v1022 = vpack.c.b16 %v778, %v774
    %v1023 = vpack.c.b16 %v783, %v779
    %v1024 = vpack.c.b16 %v784, %v780
    %v1025 = vpack.c.b16 %v785, %v781
    %v1026 = vpack.c.b16 %v786, %v782
    %v1027 = vpack.c.b16 %v791, %v787
    %v1028 = vpack.c.b16 %v792, %v788
    %v1029 = vpack.c.b16 %v793, %v789
    %v1030 = vpack.c.b16 %v794, %v790
    %v1031 = vpack.c.b16 %v799, %v795
    %v1032 = vpack.c.b16 %v800, %v796
    %v1033 = vpack.c.b16 %v801, %v797
    %v1034 = vpack.c.b16 %v802, %v798
    %v1035 = vpack.c.b16 %v807, %v803
    %v1036 = vpack.c.b16 %v808, %v804
    %v1037 = vpack.c.b16 %v809, %v805
    %v1038 = vpack.c.b16 %v810, %v806
    %v1039 = vpack.c.b16 %v815, %v811
    %v1040 = vpack.c.b16 %v816, %v812
    %v1041 = vpack.c.b16 %v817, %v813
    %v1042 = vpack.c.b16 %v818, %v814
    %v1043 = vpack.c.b16 %v823, %v819
    %v1044 = vpack.c.b16 %v824, %v820
    %v1045 = vpack.c.b16 %v825, %v821
    %v1046 = vpack.c.b16 %v826, %v822
    %v1047 = vpack.c.b16 %v831, %v827
    %v1048 = vpack.c.b16 %v832, %v828
    %v1049 = vpack.c.b16 %v833, %v829
    %v1050 = vpack.c.b16 %v834, %v830
    %v1051 = vpack.c.b16 %v839, %v835
    %v1052 = vpack.c.b16 %v840, %v836
    %v1053 = vpack.c.b16 %v841, %v837
    %v1054 = vpack.c.b16 %v842, %v838
    %v1055 = vpack.c.b16 %v847, %v843
    %v1056 = vpack.c.b16 %v848, %v844
    %v1057 = vpack.c.b16 %v849, %v845
    %v1058 = vpack.c.b16 %v850, %v846
    %v1059 = vpack.c.b16 %v855, %v851
    %v1060 = vpack.c.b16 %v856, %v852
    %v1061 = vpack.c.b16 %v857, %v853
    %v1062 = vpack.c.b16 %v858, %v854
    %v1063 = vpack.c.b16 %v863, %v859
    %v1064 = vpack.c.b16 %v864, %v860
    %v1065 = vpack.c.b16 %v865, %v861
    %v1066 = vpack.c.b16 %v866, %v862
    %v1067 = vpack.c.b16 %v871, %v867
    %v1068 = vpack.c.b16 %v872, %v868
    %v1069 = vpack.c.b16 %v873, %v869
    %v1070 = vpack.c.b16 %v874, %v870
    %vm1267 = vcmask 130048
    %v1269 = vsel %vm1267, %v80, 0
    %1271 = vmatpush.bf16.msra.mxu0 %v903
    %1272 = vmatpush.bf16.msra.mxu0 %v899
    %1273 = vmatpush.bf16.msra.mxu0 %v895
    %1274 = vmatpush.bf16.msra.mxu0 %v891
    %1275 = vmatpush.bf16.msra.mxu0 %v887
    %1276 = vmatpush.bf16.msra.mxu0 %v883
    %1277 = vmatpush.bf16.msra.mxu0 %v879
    %1278 = vmatpush.bf16.msra.mxu0 %v875
    %1279 = vmatmul.bf16.gmra.mxu0 %v74
    %v1280 = vpop.f32.mrf.mxu0
    %v1281 = vadd.f32 %v279, %v1280
    %v1282 = vpop.f32.mrf.mxu0
    %v1283 = vadd.f32 %v279, %v1282
    %1284 = vdwg.mxu0
    %1285 = vmatpush.bf16.msra.mxu0 %v935
    %1286 = vmatpush.bf16.msra.mxu0 %v931
    %1287 = vmatpush.bf16.msra.mxu0 %v927
    %1288 = vmatpush.bf16.msra.mxu0 %v923
    %1289 = vmatpush.bf16.msra.mxu0 %v919
    %1290 = vmatpush.bf16.msra.mxu0 %v915
    %1291 = vmatpush.bf16.msra.mxu0 %v911
    %1292 = vmatpush.bf16.msra.mxu0 %v907
    %1293 = vmatmul.bf16.gmra.mxu0 %v75
    %v1294 = vpop.f32.mrf.mxu0
    %v1295 = vadd.f32 %v1281, %v1294
    %v1296 = vpop.f32.mrf.mxu0
    %v1297 = vadd.f32 %v1283, %v1296
    %1298 = vdwg.mxu0
    %1299 = vmatpush.bf16.msra.mxu0 %v967
    %1300 = vmatpush.bf16.msra.mxu0 %v963
    %1301 = vmatpush.bf16.msra.mxu0 %v959
    %1302 = vmatpush.bf16.msra.mxu0 %v955
    %1303 = vmatpush.bf16.msra.mxu0 %v951
    %1304 = vmatpush.bf16.msra.mxu0 %v947
    %1305 = vmatpush.bf16.msra.mxu0 %v943
    %1306 = vmatpush.bf16.msra.mxu0 %v939
    %1307 = vmatmul.bf16.gmra.mxu0 %v76
    %v1308 = vpop.f32.mrf.mxu0
    %v1309 = vadd.f32 %v1295, %v1308
    %v1310 = vpop.f32.mrf.mxu0
    %v1311 = vadd.f32 %v1297, %v1310
    %1312 = vdwg.mxu0
    %1313 = vmatpush.bf16.msra.mxu0 %v999
    %1314 = vmatpush.bf16.msra.mxu0 %v995
    %1315 = vmatpush.bf16.msra.mxu0 %v991
    %1316 = vmatpush.bf16.msra.mxu0 %v987
    %1317 = vmatpush.bf16.msra.mxu0 %v983
    %1318 = vmatpush.bf16.msra.mxu0 %v979
    %1319 = vmatpush.bf16.msra.mxu0 %v975
    %1320 = vmatpush.bf16.msra.mxu0 %v971
    %1321 = vmatmul.bf16.gmra.mxu0 %v77
    %v1322 = vpop.f32.mrf.mxu0
    %v1323 = vadd.f32 %v1309, %v1322
    %v1324 = vpop.f32.mrf.mxu0
    %v1325 = vadd.f32 %v1311, %v1324
    %1326 = vdwg.mxu0
    %1327 = vmatpush.bf16.msra.mxu0 %v1031
    %1328 = vmatpush.bf16.msra.mxu0 %v1027
    %1329 = vmatpush.bf16.msra.mxu0 %v1023
    %1330 = vmatpush.bf16.msra.mxu0 %v1019
    %1331 = vmatpush.bf16.msra.mxu0 %v1015
    %1332 = vmatpush.bf16.msra.mxu0 %v1011
    %1333 = vmatpush.bf16.msra.mxu0 %v1007
    %1334 = vmatpush.bf16.msra.mxu0 %v1003
    %1335 = vmatmul.bf16.gmra.mxu0 %v78
    %v1336 = vpop.f32.mrf.mxu0
    %v1337 = vadd.f32 %v1323, %v1336
    %v1338 = vpop.f32.mrf.mxu0
    %v1339 = vadd.f32 %v1325, %v1338
    %1340 = vdwg.mxu0
    %1341 = vmatpush.bf16.msra.mxu0 %v1063
    %1342 = vmatpush.bf16.msra.mxu0 %v1059
    %1343 = vmatpush.bf16.msra.mxu0 %v1055
    %1344 = vmatpush.bf16.msra.mxu0 %v1051
    %1345 = vmatpush.bf16.msra.mxu0 %v1047
    %1346 = vmatpush.bf16.msra.mxu0 %v1043
    %1347 = vmatpush.bf16.msra.mxu0 %v1039
    %1348 = vmatpush.bf16.msra.mxu0 %v1035
    %1349 = vmatmul.bf16.gmra.mxu0 %v79
    %v1350 = vpop.f32.mrf.mxu0
    %v1351 = vadd.f32 %v1337, %v1350
    %v1352 = vpop.f32.mrf.mxu0
    %v1353 = vadd.f32 %v1339, %v1352
    %1354 = vdwg.mxu0
    %1355 = vmatpush.bf16.msra.mxu0 0
    %1356 = vmatpush.bf16.msra.mxu0 0
    %1357 = vmatpush.bf16.msra.mxu0 0
    %1358 = vmatpush.bf16.msra.mxu0 0
    %1359 = vmatpush.bf16.msra.mxu0 0
    %1360 = vmatpush.bf16.msra.mxu0 0
    %1361 = vmatpush.bf16.msra.mxu0 0
    %1362 = vmatpush.bf16.msra.mxu0 %v1067
    %1363 = vmatmul.bf16.gmra.mxu0 %v1269
    %v1364 = vpop.f32.mrf.mxu0
    %v1365 = vadd.f32 %v1351, %v1364
    %v1366 = vpop.f32.mrf.mxu0
    %v1367 = vadd.f32 %v1353, %v1366
    %1368 = vdwg.mxu0
    %1369 = vmatpush.bf16.msra.mxu0 %v904
    %1370 = vmatpush.bf16.msra.mxu0 %v900
    %1371 = vmatpush.bf16.msra.mxu0 %v896
    %1372 = vmatpush.bf16.msra.mxu0 %v892
    %1373 = vmatpush.bf16.msra.mxu0 %v888
    %1374 = vmatpush.bf16.msra.mxu0 %v884
    %1375 = vmatpush.bf16.msra.mxu0 %v880
    %1376 = vmatpush.bf16.msra.mxu0 %v876
    %1377 = vmatmul.bf16.gmra.mxu0 %v74
    %v1378 = vpop.f32.mrf.mxu0
    %v1379 = vadd.f32 %v280, %v1378
    %v1380 = vpop.f32.mrf.mxu0
    %v1381 = vadd.f32 %v280, %v1380
    %1382 = vdwg.mxu0
    %1383 = vmatpush.bf16.msra.mxu0 %v936
    %1384 = vmatpush.bf16.msra.mxu0 %v932
    %1385 = vmatpush.bf16.msra.mxu0 %v928
    %1386 = vmatpush.bf16.msra.mxu0 %v924
    %1387 = vmatpush.bf16.msra.mxu0 %v920
    %1388 = vmatpush.bf16.msra.mxu0 %v916
    %1389 = vmatpush.bf16.msra.mxu0 %v912
    %1390 = vmatpush.bf16.msra.mxu0 %v908
    %1391 = vmatmul.bf16.gmra.mxu0 %v75
    %v1392 = vpop.f32.mrf.mxu0
    %v1393 = vadd.f32 %v1379, %v1392
    %v1394 = vpop.f32.mrf.mxu0
    %v1395 = vadd.f32 %v1381, %v1394
    %1396 = vdwg.mxu0
    %1397 = vmatpush.bf16.msra.mxu0 %v968
    %1398 = vmatpush.bf16.msra.mxu0 %v964
    %1399 = vmatpush.bf16.msra.mxu0 %v960
    %1400 = vmatpush.bf16.msra.mxu0 %v956
    %1401 = vmatpush.bf16.msra.mxu0 %v952
    %1402 = vmatpush.bf16.msra.mxu0 %v948
    %1403 = vmatpush.bf16.msra.mxu0 %v944
    %1404 = vmatpush.bf16.msra.mxu0 %v940
    %1405 = vmatmul.bf16.gmra.mxu0 %v76
    %v1406 = vpop.f32.mrf.mxu0
    %v1407 = vadd.f32 %v1393, %v1406
    %v1408 = vpop.f32.mrf.mxu0
    %v1409 = vadd.f32 %v1395, %v1408
    %1410 = vdwg.mxu0
    %1411 = vmatpush.bf16.msra.mxu0 %v1000
    %1412 = vmatpush.bf16.msra.mxu0 %v996
    %1413 = vmatpush.bf16.msra.mxu0 %v992
    %1414 = vmatpush.bf16.msra.mxu0 %v988
    %1415 = vmatpush.bf16.msra.mxu0 %v984
    %1416 = vmatpush.bf16.msra.mxu0 %v980
    %1417 = vmatpush.bf16.msra.mxu0 %v976
    %1418 = vmatpush.bf16.msra.mxu0 %v972
    %1419 = vmatmul.bf16.gmra.mxu0 %v77
    %v1420 = vpop.f32.mrf.mxu0
    %v1421 = vadd.f32 %v1407, %v1420
    %v1422 = vpop.f32.mrf.mxu0
    %v1423 = vadd.f32 %v1409, %v1422
    %1424 = vdwg.mxu0
    %1425 = vmatpush.bf16.msra.mxu0 %v1032
    %1426 = vmatpush.bf16.msra.mxu0 %v1028
    %1427 = vmatpush.bf16.msra.mxu0 %v1024
    %1428 = vmatpush.bf16.msra.mxu0 %v1020
    %1429 = vmatpush.bf16.msra.mxu0 %v1016
    %1430 = vmatpush.bf16.msra.mxu0 %v1012
    %1431 = vmatpush.bf16.msra.mxu0 %v1008
    %1432 = vmatpush.bf16.msra.mxu0 %v1004
    %1433 = vmatmul.bf16.gmra.mxu0 %v78
    %v1434 = vpop.f32.mrf.mxu0
    %v1435 = vadd.f32 %v1421, %v1434
    %v1436 = vpop.f32.mrf.mxu0
    %v1437 = vadd.f32 %v1423, %v1436
    %1438 = vdwg.mxu0
    %1439 = vmatpush.bf16.msra.mxu0 %v1064
    %1440 = vmatpush.bf16.msra.mxu0 %v1060
    %1441 = vmatpush.bf16.msra.mxu0 %v1056
    %1442 = vmatpush.bf16.msra.mxu0 %v1052
    %1443 = vmatpush.bf16.msra.mxu0 %v1048
    %1444 = vmatpush.bf16.msra.mxu0 %v1044
    %1445 = vmatpush.bf16.msra.mxu0 %v1040
    %1446 = vmatpush.bf16.msra.mxu0 %v1036
    %1447 = vmatmul.bf16.gmra.mxu0 %v79
    %v1448 = vpop.f32.mrf.mxu0
    %v1449 = vadd.f32 %v1435, %v1448
    %v1450 = vpop.f32.mrf.mxu0
    %v1451 = vadd.f32 %v1437, %v1450
    %1452 = vdwg.mxu0
    %1453 = vmatpush.bf16.msra.mxu0 0
    %1454 = vmatpush.bf16.msra.mxu0 0
    %1455 = vmatpush.bf16.msra.mxu0 0
    %1456 = vmatpush.bf16.msra.mxu0 0
    %1457 = vmatpush.bf16.msra.mxu0 0
    %1458 = vmatpush.bf16.msra.mxu0 0
    %1459 = vmatpush.bf16.msra.mxu0 0
    %1460 = vmatpush.bf16.msra.mxu0 %v1068
    %1461 = vmatmul.bf16.gmra.mxu0 %v1269
    %v1462 = vpop.f32.mrf.mxu0
    %v1463 = vadd.f32 %v1449, %v1462
    %v1464 = vpop.f32.mrf.mxu0
    %v1465 = vadd.f32 %v1451, %v1464
    %1466 = vdwg.mxu0
    %1467 = vmatpush.bf16.msra.mxu0 %v905
    %1468 = vmatpush.bf16.msra.mxu0 %v901
    %1469 = vmatpush.bf16.msra.mxu0 %v897
    %1470 = vmatpush.bf16.msra.mxu0 %v893
    %1471 = vmatpush.bf16.msra.mxu0 %v889
    %1472 = vmatpush.bf16.msra.mxu0 %v885
    %1473 = vmatpush.bf16.msra.mxu0 %v881
    %1474 = vmatpush.bf16.msra.mxu0 %v877
    %1475 = vmatmul.bf16.gmra.mxu0 %v74
    %v1476 = vpop.f32.mrf.mxu0
    %v1477 = vadd.f32 %v281, %v1476
    %v1478 = vpop.f32.mrf.mxu0
    %v1479 = vadd.f32 %v281, %v1478
    %1480 = vdwg.mxu0
    %1481 = vmatpush.bf16.msra.mxu0 %v937
    %1482 = vmatpush.bf16.msra.mxu0 %v933
    %1483 = vmatpush.bf16.msra.mxu0 %v929
    %1484 = vmatpush.bf16.msra.mxu0 %v925
    %1485 = vmatpush.bf16.msra.mxu0 %v921
    %1486 = vmatpush.bf16.msra.mxu0 %v917
    %1487 = vmatpush.bf16.msra.mxu0 %v913
    %1488 = vmatpush.bf16.msra.mxu0 %v909
    %1489 = vmatmul.bf16.gmra.mxu0 %v75
    %v1490 = vpop.f32.mrf.mxu0
    %v1491 = vadd.f32 %v1477, %v1490
    %v1492 = vpop.f32.mrf.mxu0
    %v1493 = vadd.f32 %v1479, %v1492
    %1494 = vdwg.mxu0
    %1495 = vmatpush.bf16.msra.mxu0 %v969
    %1496 = vmatpush.bf16.msra.mxu0 %v965
    %1497 = vmatpush.bf16.msra.mxu0 %v961
    %1498 = vmatpush.bf16.msra.mxu0 %v957
    %1499 = vmatpush.bf16.msra.mxu0 %v953
    %1500 = vmatpush.bf16.msra.mxu0 %v949
    %1501 = vmatpush.bf16.msra.mxu0 %v945
    %1502 = vmatpush.bf16.msra.mxu0 %v941
    %1503 = vmatmul.bf16.gmra.mxu0 %v76
    %v1504 = vpop.f32.mrf.mxu0
    %v1505 = vadd.f32 %v1491, %v1504
    %v1506 = vpop.f32.mrf.mxu0
    %v1507 = vadd.f32 %v1493, %v1506
    %1508 = vdwg.mxu0
    %1509 = vmatpush.bf16.msra.mxu0 %v1001
    %1510 = vmatpush.bf16.msra.mxu0 %v997
    %1511 = vmatpush.bf16.msra.mxu0 %v993
    %1512 = vmatpush.bf16.msra.mxu0 %v989
    %1513 = vmatpush.bf16.msra.mxu0 %v985
    %1514 = vmatpush.bf16.msra.mxu0 %v981
    %1515 = vmatpush.bf16.msra.mxu0 %v977
    %1516 = vmatpush.bf16.msra.mxu0 %v973
    %1517 = vmatmul.bf16.gmra.mxu0 %v77
    %v1518 = vpop.f32.mrf.mxu0
    %v1519 = vadd.f32 %v1505, %v1518
    %v1520 = vpop.f32.mrf.mxu0
    %v1521 = vadd.f32 %v1507, %v1520
    %1522 = vdwg.mxu0
    %1523 = vmatpush.bf16.msra.mxu0 %v1033
    %1524 = vmatpush.bf16.msra.mxu0 %v1029
    %1525 = vmatpush.bf16.msra.mxu0 %v1025
    %1526 = vmatpush.bf16.msra.mxu0 %v1021
    %1527 = vmatpush.bf16.msra.mxu0 %v1017
    %1528 = vmatpush.bf16.msra.mxu0 %v1013
    %1529 = vmatpush.bf16.msra.mxu0 %v1009
    %1530 = vmatpush.bf16.msra.mxu0 %v1005
    %1531 = vmatmul.bf16.gmra.mxu0 %v78
    %v1532 = vpop.f32.mrf.mxu0
    %v1533 = vadd.f32 %v1519, %v1532
    %v1534 = vpop.f32.mrf.mxu0
    %v1535 = vadd.f32 %v1521, %v1534
    %1536 = vdwg.mxu0
    %1537 = vmatpush.bf16.msra.mxu0 %v1065
    %1538 = vmatpush.bf16.msra.mxu0 %v1061
    %1539 = vmatpush.bf16.msra.mxu0 %v1057
    %1540 = vmatpush.bf16.msra.mxu0 %v1053
    %1541 = vmatpush.bf16.msra.mxu0 %v1049
    %1542 = vmatpush.bf16.msra.mxu0 %v1045
    %1543 = vmatpush.bf16.msra.mxu0 %v1041
    %1544 = vmatpush.bf16.msra.mxu0 %v1037
    %1545 = vmatmul.bf16.gmra.mxu0 %v79
    %v1546 = vpop.f32.mrf.mxu0
    %v1547 = vadd.f32 %v1533, %v1546
    %v1548 = vpop.f32.mrf.mxu0
    %v1549 = vadd.f32 %v1535, %v1548
    %1550 = vdwg.mxu0
    %1551 = vmatpush.bf16.msra.mxu0 0
    %1552 = vmatpush.bf16.msra.mxu0 0
    %1553 = vmatpush.bf16.msra.mxu0 0
    %1554 = vmatpush.bf16.msra.mxu0 0
    %1555 = vmatpush.bf16.msra.mxu0 0
    %1556 = vmatpush.bf16.msra.mxu0 0
    %1557 = vmatpush.bf16.msra.mxu0 0
    %1558 = vmatpush.bf16.msra.mxu0 %v1069
    %1559 = vmatmul.bf16.gmra.mxu0 %v1269
    %v1560 = vpop.f32.mrf.mxu0
    %v1561 = vadd.f32 %v1547, %v1560
    %v1562 = vpop.f32.mrf.mxu0
    %v1563 = vadd.f32 %v1549, %v1562
    %1564 = vdwg.mxu0
    %1565 = vmatpush.bf16.msra.mxu0 %v906
    %1566 = vmatpush.bf16.msra.mxu0 %v902
    %1567 = vmatpush.bf16.msra.mxu0 %v898
    %1568 = vmatpush.bf16.msra.mxu0 %v894
    %1569 = vmatpush.bf16.msra.mxu0 %v890
    %1570 = vmatpush.bf16.msra.mxu0 %v886
    %1571 = vmatpush.bf16.msra.mxu0 %v882
    %1572 = vmatpush.bf16.msra.mxu0 %v878
    %1573 = vmatmul.bf16.gmra.mxu0 %v74
    %v1574 = vpop.f32.mrf.mxu0
    %v1575 = vadd.f32 %v282, %v1574
    %v1576 = vpop.f32.mrf.mxu0
    %v1577 = vadd.f32 %v282, %v1576
    %1578 = vdwg.mxu0
    %1579 = vmatpush.bf16.msra.mxu0 %v938
    %1580 = vmatpush.bf16.msra.mxu0 %v934
    %1581 = vmatpush.bf16.msra.mxu0 %v930
    %1582 = vmatpush.bf16.msra.mxu0 %v926
    %1583 = vmatpush.bf16.msra.mxu0 %v922
    %1584 = vmatpush.bf16.msra.mxu0 %v918
    %1585 = vmatpush.bf16.msra.mxu0 %v914
    %1586 = vmatpush.bf16.msra.mxu0 %v910
    %1587 = vmatmul.bf16.gmra.mxu0 %v75
    %v1588 = vpop.f32.mrf.mxu0
    %v1589 = vadd.f32 %v1575, %v1588
    %v1590 = vpop.f32.mrf.mxu0
    %v1591 = vadd.f32 %v1577, %v1590
    %1592 = vdwg.mxu0
    %1593 = vmatpush.bf16.msra.mxu0 %v970
    %1594 = vmatpush.bf16.msra.mxu0 %v966
    %1595 = vmatpush.bf16.msra.mxu0 %v962
    %1596 = vmatpush.bf16.msra.mxu0 %v958
    %1597 = vmatpush.bf16.msra.mxu0 %v954
    %1598 = vmatpush.bf16.msra.mxu0 %v950
    %1599 = vmatpush.bf16.msra.mxu0 %v946
    %1600 = vmatpush.bf16.msra.mxu0 %v942
    %1601 = vmatmul.bf16.gmra.mxu0 %v76
    %v1602 = vpop.f32.mrf.mxu0
    %v1603 = vadd.f32 %v1589, %v1602
    %v1604 = vpop.f32.mrf.mxu0
    %v1605 = vadd.f32 %v1591, %v1604
    %1606 = vdwg.mxu0
    %1607 = vmatpush.bf16.msra.mxu0 %v1002
    %1608 = vmatpush.bf16.msra.mxu0 %v998
    %1609 = vmatpush.bf16.msra.mxu0 %v994
    %1610 = vmatpush.bf16.msra.mxu0 %v990
    %1611 = vmatpush.bf16.msra.mxu0 %v986
    %1612 = vmatpush.bf16.msra.mxu0 %v982
    %1613 = vmatpush.bf16.msra.mxu0 %v978
    %1614 = vmatpush.bf16.msra.mxu0 %v974
    %1615 = vmatmul.bf16.gmra.mxu0 %v77
    %v1616 = vpop.f32.mrf.mxu0
    %v1617 = vadd.f32 %v1603, %v1616
    %v1618 = vpop.f32.mrf.mxu0
    %v1619 = vadd.f32 %v1605, %v1618
    %1620 = vdwg.mxu0
    %1621 = vmatpush.bf16.msra.mxu0 %v1034
    %1622 = vmatpush.bf16.msra.mxu0 %v1030
    %1623 = vmatpush.bf16.msra.mxu0 %v1026
    %1624 = vmatpush.bf16.msra.mxu0 %v1022
    %1625 = vmatpush.bf16.msra.mxu0 %v1018
    %1626 = vmatpush.bf16.msra.mxu0 %v1014
    %1627 = vmatpush.bf16.msra.mxu0 %v1010
    %1628 = vmatpush.bf16.msra.mxu0 %v1006
    %1629 = vmatmul.bf16.gmra.mxu0 %v78
    %v1630 = vpop.f32.mrf.mxu0
    %v1631 = vadd.f32 %v1617, %v1630
    %v1632 = vpop.f32.mrf.mxu0
    %v1633 = vadd.f32 %v1619, %v1632
    %1634 = vdwg.mxu0
    %1635 = vmatpush.bf16.msra.mxu0 %v1066
    %1636 = vmatpush.bf16.msra.mxu0 %v1062
    %1637 = vmatpush.bf16.msra.mxu0 %v1058
    %1638 = vmatpush.bf16.msra.mxu0 %v1054
    %1639 = vmatpush.bf16.msra.mxu0 %v1050
    %1640 = vmatpush.bf16.msra.mxu0 %v1046
    %1641 = vmatpush.bf16.msra.mxu0 %v1042
    %1642 = vmatpush.bf16.msra.mxu0 %v1038
    %1643 = vmatmul.bf16.gmra.mxu0 %v79
    %v1644 = vpop.f32.mrf.mxu0
    %v1645 = vadd.f32 %v1631, %v1644
    %v1646 = vpop.f32.mrf.mxu0
    %v1647 = vadd.f32 %v1633, %v1646
    %1648 = vdwg.mxu0
    %1649 = vmatpush.bf16.msra.mxu0 0
    %1650 = vmatpush.bf16.msra.mxu0 0
    %1651 = vmatpush.bf16.msra.mxu0 0
    %1652 = vmatpush.bf16.msra.mxu0 0
    %1653 = vmatpush.bf16.msra.mxu0 0
    %1654 = vmatpush.bf16.msra.mxu0 0
    %1655 = vmatpush.bf16.msra.mxu0 0
    %1656 = vmatpush.bf16.msra.mxu0 %v1070
    %1657 = vmatmul.bf16.gmra.mxu0 %v1269
    %v1658 = vpop.f32.mrf.mxu0
    %v1659 = vadd.f32 %v1645, %v1658
    %v1660 = vpop.f32.mrf.mxu0
    %v1661 = vadd.f32 %v1647, %v1660
    %1662 = vdwg.mxu0
    %v1663 = vmax.f32 %v1365, 0.0
    %v1664 = vmax.f32 %v1463, 0.0
    %v1665 = vmax.f32 %v1561, 0.0
    %v1666 = vmax.f32 %v1659, 0.0
    %v1667 = vmax.f32 %v1367, 0.0
    %v1668 = vmax.f32 %v1465, 0.0
    %v1669 = vmax.f32 %v1563, 0.0
    %v1670 = vmax.f32 %v1661, 0.0
    %v1671 = vpack.c.bf16 %v1667, %v1663
    %v1672 = vpack.c.bf16 %v1668, %v1664
    %v1673 = vpack.c.bf16 %v1669, %v1665
    %v1674 = vpack.c.bf16 %v1670, %v1666
    %v1675 = vld [vmem:[#allocation5] sm:$0xff]
    %v1676 = vld [vmem:[#allocation5 + $0x8] sm:$0xff]
    %v1677 = vld [vmem:[#allocation5 + $0x10] sm:$0xff]
    %v1678 = vld [vmem:[#allocation5 + $0x18] sm:$0xff]
    %v1679 = vld [vmem:[#allocation5 + $0x20] sm:$0xff]
    %v1680 = vld [vmem:[#allocation5 + $0x28] sm:$0xff]
    %v1681 = vld [vmem:[#allocation5 + $0x30] sm:$0xff]
    %v1682 = vld [vmem:[#allocation5 + $0x38] sm:$0xff]
    %v1683 = vld [vmem:[#allocation5 + $0x40] sm:$0xff]
    %v1684 = vld [vmem:[#allocation5 + $0x48] sm:$0xff]
    %v1685 = vld [vmem:[#allocation5 + $0x50] sm:$0xff]
    %v1686 = vld [vmem:[#allocation5 + $0x58] sm:$0xff]
    %v1687 = vld [vmem:[#allocation5 + $0x60] sm:$0xff]
    %v1688 = vld [vmem:[#allocation5 + $0x68] sm:$0xff]
    %v1689 = vld [vmem:[#allocation5 + $0x70] sm:$0xff]
    %v1690 = vld [vmem:[#allocation5 + $0x78] sm:$0xff]
    %v1691 = vld [vmem:[#allocation5 + $0x80] sm:$0xff]
    %v1692 = vld [vmem:[#allocation5 + $0x88] sm:$0xff]
    %v1693 = vld [vmem:[#allocation5 + $0x90] sm:$0xff]
    %v1694 = vld [vmem:[#allocation5 + $0x98] sm:$0xff]
    %v1695 = vld [vmem:[#allocation5 + $0xa0] sm:$0xff]
    %v1696 = vld [vmem:[#allocation5 + $0xa8] sm:$0xff]
    %v1697 = vld [vmem:[#allocation5 + $0xb0] sm:$0xff]
    %v1698 = vld [vmem:[#allocation5 + $0xb8] sm:$0xff]
    %v1699 = vld [vmem:[#allocation5 + $0xc0] sm:$0xff]
    %v1700 = vld [vmem:[#allocation5 + $0xc8] sm:$0xff]
    %v1701 = vld [vmem:[#allocation5 + $0xd0] sm:$0xff]
    %v1702 = vld [vmem:[#allocation5 + $0xd8] sm:$0xff]
    %v1703 = vld [vmem:[#allocation5 + $0xe0] sm:$0xff]
    %v1704 = vld [vmem:[#allocation5 + $0xe8] sm:$0xff]
    %v1705 = vld [vmem:[#allocation5 + $0xf0] sm:$0xff]
    %v1706 = vld [vmem:[#allocation5 + $0xf8] sm:$0xff]
    %v1707 = vld [vmem:[#allocation5 + $0x100] sm:$0xff]
    %v1708 = vld [vmem:[#allocation5 + $0x108] sm:$0xff]
    %v1709 = vld [vmem:[#allocation5 + $0x110] sm:$0xff]
    %v1710 = vld [vmem:[#allocation5 + $0x118] sm:$0xff]
    %v1711 = vld [vmem:[#allocation5 + $0x120] sm:$0xff]
    %v1712 = vld [vmem:[#allocation5 + $0x128] sm:$0xff]
    %v1713 = vld [vmem:[#allocation5 + $0x130] sm:$0xff]
    %v1714 = vld [vmem:[#allocation5 + $0x138] sm:$0xff]
    %v1715 = vld [vmem:[#allocation5 + $0x140] sm:$0xff]
    %v1716 = vld [vmem:[#allocation5 + $0x148] sm:$0xff]
    %v1717 = vld [vmem:[#allocation5 + $0x150] sm:$0xff]
    %v1718 = vld [vmem:[#allocation5 + $0x158] sm:$0xff]
    %v1719 = vld [vmem:[#allocation5 + $0x160] sm:$0xff]
    %v1720 = vld [vmem:[#allocation5 + $0x168] sm:$0xff]
    %v1721 = vld [vmem:[#allocation5 + $0x170] sm:$0xff]
    %v1722 = vld [vmem:[#allocation5 + $0x178] sm:$0xff]
    %v1723 = vld [vmem:[#allocation5 + $0x180] sm:$0xff]
    %v1724 = vld [vmem:[#allocation5 + $0x188] sm:$0xff]
    %v1725 = vld [vmem:[#allocation5 + $0x190] sm:$0xff]
    %v1726 = vld [vmem:[#allocation5 + $0x198] sm:$0xff]
    %v1727 = vld [vmem:[#allocation5 + $0x1a0] sm:$0xff]
    %v1728 = vld [vmem:[#allocation5 + $0x1a8] sm:$0xff]
    %v1729 = vld [vmem:[#allocation5 + $0x1b0] sm:$0xff]
    %v1730 = vld [vmem:[#allocation5 + $0x1b8] sm:$0xff]
    %v1731 = vld [vmem:[#allocation5 + $0x1c0] sm:$0xff]
    %v1732 = vld [vmem:[#allocation5 + $0x1c8] sm:$0xff]
    %v1733 = vld [vmem:[#allocation5 + $0x1d0] sm:$0xff]
    %v1734 = vld [vmem:[#allocation5 + $0x1d8] sm:$0xff]
    %v1735 = vld [vmem:[#allocation5 + $0x1e0] sm:$0xff]
    %v1736 = vld [vmem:[#allocation5 + $0x1e8] sm:$0xff]
    %v1737 = vld [vmem:[#allocation5 + $0x1f0] sm:$0xff]
    %v1738 = vld [vmem:[#allocation5 + $0x1f8] sm:$0xff]
    %v1739 = vld [vmem:[#allocation5 + $0x200] sm:$0xff]
    %v1740 = vld [vmem:[#allocation5 + $0x208] sm:$0xff]
    %v1741 = vld [vmem:[#allocation5 + $0x210] sm:$0xff]
    %v1742 = vld [vmem:[#allocation5 + $0x218] sm:$0xff]
    %v1743 = vld [vmem:[#allocation5 + $0x220] sm:$0xff]
    %v1744 = vld [vmem:[#allocation5 + $0x228] sm:$0xff]
    %v1745 = vld [vmem:[#allocation5 + $0x230] sm:$0xff]
    %v1746 = vld [vmem:[#allocation5 + $0x238] sm:$0xff]
    %v1747 = vld [vmem:[#allocation5 + $0x240] sm:$0xff]
    %v1748 = vld [vmem:[#allocation5 + $0x248] sm:$0xff]
    %v1749 = vld [vmem:[#allocation5 + $0x250] sm:$0xff]
    %v1750 = vld [vmem:[#allocation5 + $0x258] sm:$0xff]
    %v1751 = vld [vmem:[#allocation5 + $0x260] sm:$0xff]
    %v1752 = vld [vmem:[#allocation5 + $0x268] sm:$0xff]
    %v1753 = vld [vmem:[#allocation5 + $0x270] sm:$0xff]
    %v1754 = vld [vmem:[#allocation5 + $0x278] sm:$0xff]
    %v1755 = vld [vmem:[#allocation5 + $0x280] sm:$0xff]
    %v1756 = vld [vmem:[#allocation5 + $0x288] sm:$0xff]
    %v1757 = vld [vmem:[#allocation5 + $0x290] sm:$0xff]
    %v1758 = vld [vmem:[#allocation5 + $0x298] sm:$0xff]
    %v1759 = vld [vmem:[#allocation5 + $0x2a0] sm:$0xff]
    %v1760 = vld [vmem:[#allocation5 + $0x2a8] sm:$0xff]
    %v1761 = vld [vmem:[#allocation5 + $0x2b0] sm:$0xff]
    %v1762 = vld [vmem:[#allocation5 + $0x2b8] sm:$0xff]
    %v1763 = vld [vmem:[#allocation5 + $0x2c0] sm:$0xff]
    %v1764 = vld [vmem:[#allocation5 + $0x2c8] sm:$0xff]
    %v1765 = vld [vmem:[#allocation5 + $0x2d0] sm:$0xff]
    %v1766 = vld [vmem:[#allocation5 + $0x2d8] sm:$0xff]
    %v1767 = vld [vmem:[#allocation5 + $0x2e0] sm:$0xff]
    %v1768 = vld [vmem:[#allocation5 + $0x2e8] sm:$0xff]
    %v1769 = vld [vmem:[#allocation5 + $0x2f0] sm:$0xff]
    %v1770 = vld [vmem:[#allocation5 + $0x2f8] sm:$0xff]
    %v1771 = vld [vmem:[#allocation5 + $0x300] sm:$0xff]
    %v1772 = vld [vmem:[#allocation5 + $0x308] sm:$0xff]
    %v1773 = vld [vmem:[#allocation5 + $0x310] sm:$0xff]
    %v1774 = vld [vmem:[#allocation5 + $0x318] sm:$0xff]
    %v1775 = vld [vmem:[#allocation5 + $0x320] sm:$0xff]
    %v1776 = vld [vmem:[#allocation5 + $0x328] sm:$0xff]
    %v1777 = vld [vmem:[#allocation5 + $0x330] sm:$0xff]
    %v1778 = vld [vmem:[#allocation5 + $0x338] sm:$0xff]
    %v1779 = vld [vmem:[#allocation5 + $0x340] sm:$0xff]
    %v1780 = vld [vmem:[#allocation5 + $0x348] sm:$0xff]
    %v1781 = vld [vmem:[#allocation5 + $0x350] sm:$0xff]
    %v1782 = vld [vmem:[#allocation5 + $0x358] sm:$0xff]
    %v1783 = vld [vmem:[#allocation5 + $0x360] sm:$0xff]
    %v1784 = vld [vmem:[#allocation5 + $0x368] sm:$0xff]
    %v1785 = vld [vmem:[#allocation5 + $0x370] sm:$0xff]
    %v1786 = vld [vmem:[#allocation5 + $0x378] sm:$0xff]
    %v1787 = vld [vmem:[#allocation5 + $0x380] sm:$0xff]
    %v1788 = vld [vmem:[#allocation5 + $0x388] sm:$0xff]
    %v1789 = vld [vmem:[#allocation5 + $0x390] sm:$0xff]
    %v1790 = vld [vmem:[#allocation5 + $0x398] sm:$0xff]
    %v1791 = vld [vmem:[#allocation5 + $0x3a0] sm:$0xff]
    %v1792 = vld [vmem:[#allocation5 + $0x3a8] sm:$0xff]
    %v1793 = vld [vmem:[#allocation5 + $0x3b0] sm:$0xff]
    %v1794 = vld [vmem:[#allocation5 + $0x3b8] sm:$0xff]
    %v1795 = vld [vmem:[#allocation5 + $0x3c0] sm:$0xff]
    %v1796 = vld [vmem:[#allocation5 + $0x3c8] sm:$0xff]
    %v1797 = vld [vmem:[#allocation5 + $0x3d0] sm:$0xff]
    %v1798 = vld [vmem:[#allocation5 + $0x3d8] sm:$0xff]
    %v1799 = vld [vmem:[#allocation5 + $0x3e0] sm:$0xff]
    %v1800 = vld [vmem:[#allocation5 + $0x3e8] sm:$0xff]
    %v1801 = vld [vmem:[#allocation5 + $0x3f0] sm:$0xff]
    %v1802 = vld [vmem:[#allocation5 + $0x3f8] sm:$0xff]
    %v1803 = vld [vmem:[%s4] sm:$0xf]
    %v1805 = vperm.slane %v1803, 0
    %v1806 = vperm.slane %v1803, 1
    %v1807 = vperm.slane %v1803, 2
    %v1808 = vperm.slane %v1803, 3
    %v1941 = vunpack.c.l.b16 %v1675
    %v1942 = vunpack.c.h.b16 %v1675
    %v1943 = vunpack.c.l.b16 %v1676
    %v1944 = vunpack.c.h.b16 %v1676
    %v1945 = vunpack.c.l.b16 %v1677
    %v1946 = vunpack.c.h.b16 %v1677
    %v1947 = vunpack.c.l.b16 %v1678
    %v1948 = vunpack.c.h.b16 %v1678
    %v1949 = vunpack.c.l.b16 %v1679
    %v1950 = vunpack.c.h.b16 %v1679
    %v1951 = vunpack.c.l.b16 %v1680
    %v1952 = vunpack.c.h.b16 %v1680
    %v1953 = vunpack.c.l.b16 %v1681
    %v1954 = vunpack.c.h.b16 %v1681
    %v1955 = vunpack.c.l.b16 %v1682
    %v1956 = vunpack.c.h.b16 %v1682
    %v1957 = vunpack.c.l.b16 %v1683
    %v1958 = vunpack.c.h.b16 %v1683
    %v1959 = vunpack.c.l.b16 %v1684
    %v1960 = vunpack.c.h.b16 %v1684
    %v1961 = vunpack.c.l.b16 %v1685
    %v1962 = vunpack.c.h.b16 %v1685
    %v1963 = vunpack.c.l.b16 %v1686
    %v1964 = vunpack.c.h.b16 %v1686
    %v1965 = vunpack.c.l.b16 %v1687
    %v1966 = vunpack.c.h.b16 %v1687
    %v1967 = vunpack.c.l.b16 %v1688
    %v1968 = vunpack.c.h.b16 %v1688
    %v1969 = vunpack.c.l.b16 %v1689
    %v1970 = vunpack.c.h.b16 %v1689
    %v1971 = vunpack.c.l.b16 %v1690
    %v1972 = vunpack.c.h.b16 %v1690
    %v1973 = vunpack.c.l.b16 %v1691
    %v1974 = vunpack.c.h.b16 %v1691
    %v1975 = vunpack.c.l.b16 %v1692
    %v1976 = vunpack.c.h.b16 %v1692
    %v1977 = vunpack.c.l.b16 %v1693
    %v1978 = vunpack.c.h.b16 %v1693
    %v1979 = vunpack.c.l.b16 %v1694
    %v1980 = vunpack.c.h.b16 %v1694
    %v1981 = vunpack.c.l.b16 %v1695
    %v1982 = vunpack.c.h.b16 %v1695
    %v1983 = vunpack.c.l.b16 %v1696
    %v1984 = vunpack.c.h.b16 %v1696
    %v1985 = vunpack.c.l.b16 %v1697
    %v1986 = vunpack.c.h.b16 %v1697
    %v1987 = vunpack.c.l.b16 %v1698
    %v1988 = vunpack.c.h.b16 %v1698
    %v1989 = vunpack.c.l.b16 %v1699
    %v1990 = vunpack.c.h.b16 %v1699
    %v1991 = vunpack.c.l.b16 %v1700
    %v1992 = vunpack.c.h.b16 %v1700
    %v1993 = vunpack.c.l.b16 %v1701
    %v1994 = vunpack.c.h.b16 %v1701
    %v1995 = vunpack.c.l.b16 %v1702
    %v1996 = vunpack.c.h.b16 %v1702
    %v1997 = vunpack.c.l.b16 %v1703
    %v1998 = vunpack.c.h.b16 %v1703
    %v1999 = vunpack.c.l.b16 %v1704
    %v2000 = vunpack.c.h.b16 %v1704
    %v2001 = vunpack.c.l.b16 %v1705
    %v2002 = vunpack.c.h.b16 %v1705
    %v2003 = vunpack.c.l.b16 %v1706
    %v2004 = vunpack.c.h.b16 %v1706
    %v2005 = vunpack.c.l.b16 %v1707
    %v2006 = vunpack.c.h.b16 %v1707
    %v2007 = vunpack.c.l.b16 %v1708
    %v2008 = vunpack.c.h.b16 %v1708
    %v2009 = vunpack.c.l.b16 %v1709
    %v2010 = vunpack.c.h.b16 %v1709
    %v2011 = vunpack.c.l.b16 %v1710
    %v2012 = vunpack.c.h.b16 %v1710
    %v2013 = vunpack.c.l.b16 %v1711
    %v2014 = vunpack.c.h.b16 %v1711
    %v2015 = vunpack.c.l.b16 %v1712
    %v2016 = vunpack.c.h.b16 %v1712
    %v2017 = vunpack.c.l.b16 %v1713
    %v2018 = vunpack.c.h.b16 %v1713
    %v2019 = vunpack.c.l.b16 %v1714
    %v2020 = vunpack.c.h.b16 %v1714
    %v2021 = vunpack.c.l.b16 %v1715
    %v2022 = vunpack.c.h.b16 %v1715
    %v2023 = vunpack.c.l.b16 %v1716
    %v2024 = vunpack.c.h.b16 %v1716
    %v2025 = vunpack.c.l.b16 %v1717
    %v2026 = vunpack.c.h.b16 %v1717
    %v2027 = vunpack.c.l.b16 %v1718
    %v2028 = vunpack.c.h.b16 %v1718
    %v2029 = vunpack.c.l.b16 %v1719
    %v2030 = vunpack.c.h.b16 %v1719
    %v2031 = vunpack.c.l.b16 %v1720
    %v2032 = vunpack.c.h.b16 %v1720
    %v2033 = vunpack.c.l.b16 %v1721
    %v2034 = vunpack.c.h.b16 %v1721
    %v2035 = vunpack.c.l.b16 %v1722
    %v2036 = vunpack.c.h.b16 %v1722
    %v2037 = vunpack.c.l.b16 %v1723
    %v2038 = vunpack.c.h.b16 %v1723
    %v2039 = vunpack.c.l.b16 %v1724
    %v2040 = vunpack.c.h.b16 %v1724
    %v2041 = vunpack.c.l.b16 %v1725
    %v2042 = vunpack.c.h.b16 %v1725
    %v2043 = vunpack.c.l.b16 %v1726
    %v2044 = vunpack.c.h.b16 %v1726
    %v2045 = vunpack.c.l.b16 %v1727
    %v2046 = vunpack.c.h.b16 %v1727
    %v2047 = vunpack.c.l.b16 %v1728
    %v2048 = vunpack.c.h.b16 %v1728
    %v2049 = vunpack.c.l.b16 %v1729
    %v2050 = vunpack.c.h.b16 %v1729
    %v2051 = vunpack.c.l.b16 %v1730
    %v2052 = vunpack.c.h.b16 %v1730
    %v2053 = vunpack.c.l.b16 %v1731
    %v2054 = vunpack.c.h.b16 %v1731
    %v2055 = vunpack.c.l.b16 %v1732
    %v2056 = vunpack.c.h.b16 %v1732
    %v2057 = vunpack.c.l.b16 %v1733
    %v2058 = vunpack.c.h.b16 %v1733
    %v2059 = vunpack.c.l.b16 %v1734
    %v2060 = vunpack.c.h.b16 %v1734
    %v2061 = vunpack.c.l.b16 %v1735
    %v2062 = vunpack.c.h.b16 %v1735
    %v2063 = vunpack.c.l.b16 %v1736
    %v2064 = vunpack.c.h.b16 %v1736
    %v2065 = vunpack.c.l.b16 %v1737
    %v2066 = vunpack.c.h.b16 %v1737
    %v2067 = vunpack.c.l.b16 %v1738
    %v2068 = vunpack.c.h.b16 %v1738
    %v2069 = vunpack.c.l.b16 %v1739
    %v2070 = vunpack.c.h.b16 %v1739
    %v2071 = vunpack.c.l.b16 %v1740
    %v2072 = vunpack.c.h.b16 %v1740
    %v2073 = vunpack.c.l.b16 %v1741
    %v2074 = vunpack.c.h.b16 %v1741
    %v2075 = vunpack.c.l.b16 %v1742
    %v2076 = vunpack.c.h.b16 %v1742
    %v2077 = vunpack.c.l.b16 %v1743
    %v2078 = vunpack.c.h.b16 %v1743
    %v2079 = vunpack.c.l.b16 %v1744
    %v2080 = vunpack.c.h.b16 %v1744
    %v2081 = vunpack.c.l.b16 %v1745
    %v2082 = vunpack.c.h.b16 %v1745
    %v2083 = vunpack.c.l.b16 %v1746
    %v2084 = vunpack.c.h.b16 %v1746
    %v2085 = vunpack.c.l.b16 %v1747
    %v2086 = vunpack.c.h.b16 %v1747
    %v2087 = vunpack.c.l.b16 %v1748
    %v2088 = vunpack.c.h.b16 %v1748
    %v2089 = vunpack.c.l.b16 %v1749
    %v2090 = vunpack.c.h.b16 %v1749
    %v2091 = vunpack.c.l.b16 %v1750
    %v2092 = vunpack.c.h.b16 %v1750
    %v2093 = vunpack.c.l.b16 %v1751
    %v2094 = vunpack.c.h.b16 %v1751
    %v2095 = vunpack.c.l.b16 %v1752
    %v2096 = vunpack.c.h.b16 %v1752
    %v2097 = vunpack.c.l.b16 %v1753
    %v2098 = vunpack.c.h.b16 %v1753
    %v2099 = vunpack.c.l.b16 %v1754
    %v2100 = vunpack.c.h.b16 %v1754
    %v2101 = vunpack.c.l.b16 %v1755
    %v2102 = vunpack.c.h.b16 %v1755
    %v2103 = vunpack.c.l.b16 %v1756
    %v2104 = vunpack.c.h.b16 %v1756
    %v2105 = vunpack.c.l.b16 %v1757
    %v2106 = vunpack.c.h.b16 %v1757
    %v2107 = vunpack.c.l.b16 %v1758
    %v2108 = vunpack.c.h.b16 %v1758
    %v2109 = vunpack.c.l.b16 %v1759
    %v2110 = vunpack.c.h.b16 %v1759
    %v2111 = vunpack.c.l.b16 %v1760
    %v2112 = vunpack.c.h.b16 %v1760
    %v2113 = vunpack.c.l.b16 %v1761
    %v2114 = vunpack.c.h.b16 %v1761
    %v2115 = vunpack.c.l.b16 %v1762
    %v2116 = vunpack.c.h.b16 %v1762
    %v2117 = vunpack.c.l.b16 %v1763
    %v2118 = vunpack.c.h.b16 %v1763
    %v2119 = vunpack.c.l.b16 %v1764
    %v2120 = vunpack.c.h.b16 %v1764
    %v2121 = vunpack.c.l.b16 %v1765
    %v2122 = vunpack.c.h.b16 %v1765
    %v2123 = vunpack.c.l.b16 %v1766
    %v2124 = vunpack.c.h.b16 %v1766
    %v2125 = vunpack.c.l.b16 %v1767
    %v2126 = vunpack.c.h.b16 %v1767
    %v2127 = vunpack.c.l.b16 %v1768
    %v2128 = vunpack.c.h.b16 %v1768
    %v2129 = vunpack.c.l.b16 %v1769
    %v2130 = vunpack.c.h.b16 %v1769
    %v2131 = vunpack.c.l.b16 %v1770
    %v2132 = vunpack.c.h.b16 %v1770
    %v2133 = vunpack.c.l.b16 %v1771
    %v2134 = vunpack.c.h.b16 %v1771
    %v2135 = vunpack.c.l.b16 %v1772
    %v2136 = vunpack.c.h.b16 %v1772
    %v2137 = vunpack.c.l.b16 %v1773
    %v2138 = vunpack.c.h.b16 %v1773
    %v2139 = vunpack.c.l.b16 %v1774
    %v2140 = vunpack.c.h.b16 %v1774
    %v2141 = vunpack.c.l.b16 %v1775
    %v2142 = vunpack.c.h.b16 %v1775
    %v2143 = vunpack.c.l.b16 %v1776
    %v2144 = vunpack.c.h.b16 %v1776
    %v2145 = vunpack.c.l.b16 %v1777
    %v2146 = vunpack.c.h.b16 %v1777
    %v2147 = vunpack.c.l.b16 %v1778
    %v2148 = vunpack.c.h.b16 %v1778
    %v2149 = vunpack.c.l.b16 %v1779
    %v2150 = vunpack.c.h.b16 %v1779
    %v2151 = vunpack.c.l.b16 %v1780
    %v2152 = vunpack.c.h.b16 %v1780
    %v2153 = vunpack.c.l.b16 %v1781
    %v2154 = vunpack.c.h.b16 %v1781
    %v2155 = vunpack.c.l.b16 %v1782
    %v2156 = vunpack.c.h.b16 %v1782
    %v2157 = vunpack.c.l.b16 %v1783
    %v2158 = vunpack.c.h.b16 %v1783
    %v2159 = vunpack.c.l.b16 %v1784
    %v2160 = vunpack.c.h.b16 %v1784
    %v2161 = vunpack.c.l.b16 %v1785
    %v2162 = vunpack.c.h.b16 %v1785
    %v2163 = vunpack.c.l.b16 %v1786
    %v2164 = vunpack.c.h.b16 %v1786
    %v2165 = vunpack.c.l.b16 %v1787
    %v2166 = vunpack.c.h.b16 %v1787
    %v2167 = vunpack.c.l.b16 %v1788
    %v2168 = vunpack.c.h.b16 %v1788
    %v2169 = vunpack.c.l.b16 %v1789
    %v2170 = vunpack.c.h.b16 %v1789
    %v2171 = vunpack.c.l.b16 %v1790
    %v2172 = vunpack.c.h.b16 %v1790
    %v2173 = vunpack.c.l.b16 %v1791
    %v2174 = vunpack.c.h.b16 %v1791
    %v2175 = vunpack.c.l.b16 %v1792
    %v2176 = vunpack.c.h.b16 %v1792
    %v2177 = vunpack.c.l.b16 %v1793
    %v2178 = vunpack.c.h.b16 %v1793
    %v2179 = vunpack.c.l.b16 %v1794
    %v2180 = vunpack.c.h.b16 %v1794
    %v2181 = vunpack.c.l.b16 %v1795
    %v2182 = vunpack.c.h.b16 %v1795
    %v2183 = vunpack.c.l.b16 %v1796
    %v2184 = vunpack.c.h.b16 %v1796
    %v2185 = vunpack.c.l.b16 %v1797
    %v2186 = vunpack.c.h.b16 %v1797
    %v2187 = vunpack.c.l.b16 %v1798
    %v2188 = vunpack.c.h.b16 %v1798
    %v2189 = vunpack.c.l.b16 %v1799
    %v2190 = vunpack.c.h.b16 %v1799
    %v2191 = vunpack.c.l.b16 %v1800
    %v2192 = vunpack.c.h.b16 %v1800
    %v2193 = vunpack.c.l.b16 %v1801
    %v2194 = vunpack.c.h.b16 %v1801
    %v2195 = vunpack.c.l.b16 %v1802
    %v2196 = vunpack.c.h.b16 %v1802
    %v2197 = vpack.c.b16 %v1945, %v1941
    %v2198 = vpack.c.b16 %v1946, %v1942
    %v2199 = vpack.c.b16 %v1947, %v1943
    %v2200 = vpack.c.b16 %v1948, %v1944
    %v2201 = vpack.c.b16 %v1953, %v1949
    %v2202 = vpack.c.b16 %v1954, %v1950
    %v2203 = vpack.c.b16 %v1955, %v1951
    %v2204 = vpack.c.b16 %v1956, %v1952
    %v2205 = vpack.c.b16 %v1961, %v1957
    %v2206 = vpack.c.b16 %v1962, %v1958
    %v2207 = vpack.c.b16 %v1963, %v1959
    %v2208 = vpack.c.b16 %v1964, %v1960
    %v2209 = vpack.c.b16 %v1969, %v1965
    %v2210 = vpack.c.b16 %v1970, %v1966
    %v2211 = vpack.c.b16 %v1971, %v1967
    %v2212 = vpack.c.b16 %v1972, %v1968
    %v2213 = vpack.c.b16 %v1977, %v1973
    %v2214 = vpack.c.b16 %v1978, %v1974
    %v2215 = vpack.c.b16 %v1979, %v1975
    %v2216 = vpack.c.b16 %v1980, %v1976
    %v2217 = vpack.c.b16 %v1985, %v1981
    %v2218 = vpack.c.b16 %v1986, %v1982
    %v2219 = vpack.c.b16 %v1987, %v1983
    %v2220 = vpack.c.b16 %v1988, %v1984
    %v2221 = vpack.c.b16 %v1993, %v1989
    %v2222 = vpack.c.b16 %v1994, %v1990
    %v2223 = vpack.c.b16 %v1995, %v1991
    %v2224 = vpack.c.b16 %v1996, %v1992
    %v2225 = vpack.c.b16 %v2001, %v1997
    %v2226 = vpack.c.b16 %v2002, %v1998
    %v2227 = vpack.c.b16 %v2003, %v1999
    %v2228 = vpack.c.b16 %v2004, %v2000
    %v2229 = vpack.c.b16 %v2009, %v2005
    %v2230 = vpack.c.b16 %v2010, %v2006
    %v2231 = vpack.c.b16 %v2011, %v2007
    %v2232 = vpack.c.b16 %v2012, %v2008
    %v2233 = vpack.c.b16 %v2017, %v2013
    %v2234 = vpack.c.b16 %v2018, %v2014
    %v2235 = vpack.c.b16 %v2019, %v2015
    %v2236 = vpack.c.b16 %v2020, %v2016
    %v2237 = vpack.c.b16 %v2025, %v2021
    %v2238 = vpack.c.b16 %v2026, %v2022
    %v2239 = vpack.c.b16 %v2027, %v2023
    %v2240 = vpack.c.b16 %v2028, %v2024
    %v2241 = vpack.c.b16 %v2033, %v2029
    %v2242 = vpack.c.b16 %v2034, %v2030
    %v2243 = vpack.c.b16 %v2035, %v2031
    %v2244 = vpack.c.b16 %v2036, %v2032
    %v2245 = vpack.c.b16 %v2041, %v2037
    %v2246 = vpack.c.b16 %v2042, %v2038
    %v2247 = vpack.c.b16 %v2043, %v2039
    %v2248 = vpack.c.b16 %v2044, %v2040
    %v2249 = vpack.c.b16 %v2049, %v2045
    %v2250 = vpack.c.b16 %v2050, %v2046
    %v2251 = vpack.c.b16 %v2051, %v2047
    %v2252 = vpack.c.b16 %v2052, %v2048
    %v2253 = vpack.c.b16 %v2057, %v2053
    %v2254 = vpack.c.b16 %v2058, %v2054
    %v2255 = vpack.c.b16 %v2059, %v2055
    %v2256 = vpack.c.b16 %v2060, %v2056
    %v2257 = vpack.c.b16 %v2065, %v2061
    %v2258 = vpack.c.b16 %v2066, %v2062
    %v2259 = vpack.c.b16 %v2067, %v2063
    %v2260 = vpack.c.b16 %v2068, %v2064
    %v2261 = vpack.c.b16 %v2073, %v2069
    %v2262 = vpack.c.b16 %v2074, %v2070
    %v2263 = vpack.c.b16 %v2075, %v2071
    %v2264 = vpack.c.b16 %v2076, %v2072
    %v2265 = vpack.c.b16 %v2081, %v2077
    %v2266 = vpack.c.b16 %v2082, %v2078
    %v2267 = vpack.c.b16 %v2083, %v2079
    %v2268 = vpack.c.b16 %v2084, %v2080
    %v2269 = vpack.c.b16 %v2089, %v2085
    %v2270 = vpack.c.b16 %v2090, %v2086
    %v2271 = vpack.c.b16 %v2091, %v2087
    %v2272 = vpack.c.b16 %v2092, %v2088
    %v2273 = vpack.c.b16 %v2097, %v2093
    %v2274 = vpack.c.b16 %v2098, %v2094
    %v2275 = vpack.c.b16 %v2099, %v2095
    %v2276 = vpack.c.b16 %v2100, %v2096
    %v2277 = vpack.c.b16 %v2105, %v2101
    %v2278 = vpack.c.b16 %v2106, %v2102
    %v2279 = vpack.c.b16 %v2107, %v2103
    %v2280 = vpack.c.b16 %v2108, %v2104
    %v2281 = vpack.c.b16 %v2113, %v2109
    %v2282 = vpack.c.b16 %v2114, %v2110
    %v2283 = vpack.c.b16 %v2115, %v2111
    %v2284 = vpack.c.b16 %v2116, %v2112
    %v2285 = vpack.c.b16 %v2121, %v2117
    %v2286 = vpack.c.b16 %v2122, %v2118
    %v2287 = vpack.c.b16 %v2123, %v2119
    %v2288 = vpack.c.b16 %v2124, %v2120
    %v2289 = vpack.c.b16 %v2129, %v2125
    %v2290 = vpack.c.b16 %v2130, %v2126
    %v2291 = vpack.c.b16 %v2131, %v2127
    %v2292 = vpack.c.b16 %v2132, %v2128
    %v2293 = vpack.c.b16 %v2137, %v2133
    %v2294 = vpack.c.b16 %v2138, %v2134
    %v2295 = vpack.c.b16 %v2139, %v2135
    %v2296 = vpack.c.b16 %v2140, %v2136
    %v2297 = vpack.c.b16 %v2145, %v2141
    %v2298 = vpack.c.b16 %v2146, %v2142
    %v2299 = vpack.c.b16 %v2147, %v2143
    %v2300 = vpack.c.b16 %v2148, %v2144
    %v2301 = vpack.c.b16 %v2153, %v2149
    %v2302 = vpack.c.b16 %v2154, %v2150
    %v2303 = vpack.c.b16 %v2155, %v2151
    %v2304 = vpack.c.b16 %v2156, %v2152
    %v2305 = vpack.c.b16 %v2161, %v2157
    %v2306 = vpack.c.b16 %v2162, %v2158
    %v2307 = vpack.c.b16 %v2163, %v2159
    %v2308 = vpack.c.b16 %v2164, %v2160
    %v2309 = vpack.c.b16 %v2169, %v2165
    %v2310 = vpack.c.b16 %v2170, %v2166
    %v2311 = vpack.c.b16 %v2171, %v2167
    %v2312 = vpack.c.b16 %v2172, %v2168
    %v2313 = vpack.c.b16 %v2177, %v2173
    %v2314 = vpack.c.b16 %v2178, %v2174
    %v2315 = vpack.c.b16 %v2179, %v2175
    %v2316 = vpack.c.b16 %v2180, %v2176
    %v2317 = vpack.c.b16 %v2185, %v2181
    %v2318 = vpack.c.b16 %v2186, %v2182
    %v2319 = vpack.c.b16 %v2187, %v2183
    %v2320 = vpack.c.b16 %v2188, %v2184
    %v2321 = vpack.c.b16 %v2193, %v2189
    %v2322 = vpack.c.b16 %v2194, %v2190
    %v2323 = vpack.c.b16 %v2195, %v2191
    %v2324 = vpack.c.b16 %v2196, %v2192
    %2453 = vmatpush.bf16.msra.mxu0 %v2225
    %2454 = vmatpush.bf16.msra.mxu0 %v2221
    %2455 = vmatpush.bf16.msra.mxu0 %v2217
    %2456 = vmatpush.bf16.msra.mxu0 %v2213
    %2457 = vmatpush.bf16.msra.mxu0 %v2209
    %2458 = vmatpush.bf16.msra.mxu0 %v2205
    %2459 = vmatpush.bf16.msra.mxu0 %v2201
    %2460 = vmatpush.bf16.msra.mxu0 %v2197
    %2461 = vmatmul.bf16.gmra.mxu0 %v1671
    %v2462 = vpop.f32.mrf.mxu0
    %v2463 = vadd.f32 %v1805, %v2462
    %v2464 = vpop.f32.mrf.mxu0
    %v2465 = vadd.f32 %v1805, %v2464
    %2466 = vdwg.mxu0
    %2467 = vmatpush.bf16.msra.mxu0 %v2257
    %2468 = vmatpush.bf16.msra.mxu0 %v2253
    %2469 = vmatpush.bf16.msra.mxu0 %v2249
    %2470 = vmatpush.bf16.msra.mxu0 %v2245
    %2471 = vmatpush.bf16.msra.mxu0 %v2241
    %2472 = vmatpush.bf16.msra.mxu0 %v2237
    %2473 = vmatpush.bf16.msra.mxu0 %v2233
    %2474 = vmatpush.bf16.msra.mxu0 %v2229
    %2475 = vmatmul.bf16.gmra.mxu0 %v1672
    %v2476 = vpop.f32.mrf.mxu0
    %v2477 = vadd.f32 %v2463, %v2476
    %v2478 = vpop.f32.mrf.mxu0
    %v2479 = vadd.f32 %v2465, %v2478
    %2480 = vdwg.mxu0
    %2481 = vmatpush.bf16.msra.mxu0 %v2289
    %2482 = vmatpush.bf16.msra.mxu0 %v2285
    %2483 = vmatpush.bf16.msra.mxu0 %v2281
    %2484 = vmatpush.bf16.msra.mxu0 %v2277
    %2485 = vmatpush.bf16.msra.mxu0 %v2273
    %2486 = vmatpush.bf16.msra.mxu0 %v2269
    %2487 = vmatpush.bf16.msra.mxu0 %v2265
    %2488 = vmatpush.bf16.msra.mxu0 %v2261
    %2489 = vmatmul.bf16.gmra.mxu0 %v1673
    %v2490 = vpop.f32.mrf.mxu0
    %v2491 = vadd.f32 %v2477, %v2490
    %v2492 = vpop.f32.mrf.mxu0
    %v2493 = vadd.f32 %v2479, %v2492
    %2494 = vdwg.mxu0
    %2495 = vmatpush.bf16.msra.mxu0 %v2321
    %2496 = vmatpush.bf16.msra.mxu0 %v2317
    %2497 = vmatpush.bf16.msra.mxu0 %v2313
    %2498 = vmatpush.bf16.msra.mxu0 %v2309
    %2499 = vmatpush.bf16.msra.mxu0 %v2305
    %2500 = vmatpush.bf16.msra.mxu0 %v2301
    %2501 = vmatpush.bf16.msra.mxu0 %v2297
    %2502 = vmatpush.bf16.msra.mxu0 %v2293
    %2503 = vmatmul.bf16.gmra.mxu0 %v1674
    %v2504 = vpop.f32.mrf.mxu0
    %v2505 = vadd.f32 %v2491, %v2504
    %v2506 = vpop.f32.mrf.mxu0
    %v2507 = vadd.f32 %v2493, %v2506
    %2508 = vdwg.mxu0
    %2509 = vmatpush.bf16.msra.mxu0 %v2226
    %2510 = vmatpush.bf16.msra.mxu0 %v2222
    %2511 = vmatpush.bf16.msra.mxu0 %v2218
    %2512 = vmatpush.bf16.msra.mxu0 %v2214
    %2513 = vmatpush.bf16.msra.mxu0 %v2210
    %2514 = vmatpush.bf16.msra.mxu0 %v2206
    %2515 = vmatpush.bf16.msra.mxu0 %v2202
    %2516 = vmatpush.bf16.msra.mxu0 %v2198
    %2517 = vmatmul.bf16.gmra.mxu0 %v1671
    %v2518 = vpop.f32.mrf.mxu0
    %v2519 = vadd.f32 %v1806, %v2518
    %v2520 = vpop.f32.mrf.mxu0
    %v2521 = vadd.f32 %v1806, %v2520
    %2522 = vdwg.mxu0
    %2523 = vmatpush.bf16.msra.mxu0 %v2258
    %2524 = vmatpush.bf16.msra.mxu0 %v2254
    %2525 = vmatpush.bf16.msra.mxu0 %v2250
    %2526 = vmatpush.bf16.msra.mxu0 %v2246
    %2527 = vmatpush.bf16.msra.mxu0 %v2242
    %2528 = vmatpush.bf16.msra.mxu0 %v2238
    %2529 = vmatpush.bf16.msra.mxu0 %v2234
    %2530 = vmatpush.bf16.msra.mxu0 %v2230
    %2531 = vmatmul.bf16.gmra.mxu0 %v1672
    %v2532 = vpop.f32.mrf.mxu0
    %v2533 = vadd.f32 %v2519, %v2532
    %v2534 = vpop.f32.mrf.mxu0
    %v2535 = vadd.f32 %v2521, %v2534
    %2536 = vdwg.mxu0
    %2537 = vmatpush.bf16.msra.mxu0 %v2290
    %2538 = vmatpush.bf16.msra.mxu0 %v2286
    %2539 = vmatpush.bf16.msra.mxu0 %v2282
    %2540 = vmatpush.bf16.msra.mxu0 %v2278
    %2541 = vmatpush.bf16.msra.mxu0 %v2274
    %2542 = vmatpush.bf16.msra.mxu0 %v2270
    %2543 = vmatpush.bf16.msra.mxu0 %v2266
    %2544 = vmatpush.bf16.msra.mxu0 %v2262
    %2545 = vmatmul.bf16.gmra.mxu0 %v1673
    %v2546 = vpop.f32.mrf.mxu0
    %v2547 = vadd.f32 %v2533, %v2546
    %v2548 = vpop.f32.mrf.mxu0
    %v2549 = vadd.f32 %v2535, %v2548
    %2550 = vdwg.mxu0
    %2551 = vmatpush.bf16.msra.mxu0 %v2322
    %2552 = vmatpush.bf16.msra.mxu0 %v2318
    %2553 = vmatpush.bf16.msra.mxu0 %v2314
    %2554 = vmatpush.bf16.msra.mxu0 %v2310
    %2555 = vmatpush.bf16.msra.mxu0 %v2306
    %2556 = vmatpush.bf16.msra.mxu0 %v2302
    %2557 = vmatpush.bf16.msra.mxu0 %v2298
    %2558 = vmatpush.bf16.msra.mxu0 %v2294
    %2559 = vmatmul.bf16.gmra.mxu0 %v1674
    %v2560 = vpop.f32.mrf.mxu0
    %v2561 = vadd.f32 %v2547, %v2560
    %v2562 = vpop.f32.mrf.mxu0
    %v2563 = vadd.f32 %v2549, %v2562
    %2564 = vdwg.mxu0
    %2565 = vmatpush.bf16.msra.mxu0 %v2227
    %2566 = vmatpush.bf16.msra.mxu0 %v2223
    %2567 = vmatpush.bf16.msra.mxu0 %v2219
    %2568 = vmatpush.bf16.msra.mxu0 %v2215
    %2569 = vmatpush.bf16.msra.mxu0 %v2211
    %2570 = vmatpush.bf16.msra.mxu0 %v2207
    %2571 = vmatpush.bf16.msra.mxu0 %v2203
    %2572 = vmatpush.bf16.msra.mxu0 %v2199
    %2573 = vmatmul.bf16.gmra.mxu0 %v1671
    %v2574 = vpop.f32.mrf.mxu0
    %v2575 = vadd.f32 %v1807, %v2574
    %v2576 = vpop.f32.mrf.mxu0
    %v2577 = vadd.f32 %v1807, %v2576
    %2578 = vdwg.mxu0
    %2579 = vmatpush.bf16.msra.mxu0 %v2259
    %2580 = vmatpush.bf16.msra.mxu0 %v2255
    %2581 = vmatpush.bf16.msra.mxu0 %v2251
    %2582 = vmatpush.bf16.msra.mxu0 %v2247
    %2583 = vmatpush.bf16.msra.mxu0 %v2243
    %2584 = vmatpush.bf16.msra.mxu0 %v2239
    %2585 = vmatpush.bf16.msra.mxu0 %v2235
    %2586 = vmatpush.bf16.msra.mxu0 %v2231
    %2587 = vmatmul.bf16.gmra.mxu0 %v1672
    %v2588 = vpop.f32.mrf.mxu0
    %v2589 = vadd.f32 %v2575, %v2588
    %v2590 = vpop.f32.mrf.mxu0
    %v2591 = vadd.f32 %v2577, %v2590
    %2592 = vdwg.mxu0
    %2593 = vmatpush.bf16.msra.mxu0 %v2291
    %2594 = vmatpush.bf16.msra.mxu0 %v2287
    %2595 = vmatpush.bf16.msra.mxu0 %v2283
    %2596 = vmatpush.bf16.msra.mxu0 %v2279
    %2597 = vmatpush.bf16.msra.mxu0 %v2275
    %2598 = vmatpush.bf16.msra.mxu0 %v2271
    %2599 = vmatpush.bf16.msra.mxu0 %v2267
    %2600 = vmatpush.bf16.msra.mxu0 %v2263
    %2601 = vmatmul.bf16.gmra.mxu0 %v1673
    %v2602 = vpop.f32.mrf.mxu0
    %v2603 = vadd.f32 %v2589, %v2602
    %v2604 = vpop.f32.mrf.mxu0
    %v2605 = vadd.f32 %v2591, %v2604
    %2606 = vdwg.mxu0
    %2607 = vmatpush.bf16.msra.mxu0 %v2323
    %2608 = vmatpush.bf16.msra.mxu0 %v2319
    %2609 = vmatpush.bf16.msra.mxu0 %v2315
    %2610 = vmatpush.bf16.msra.mxu0 %v2311
    %2611 = vmatpush.bf16.msra.mxu0 %v2307
    %2612 = vmatpush.bf16.msra.mxu0 %v2303
    %2613 = vmatpush.bf16.msra.mxu0 %v2299
    %2614 = vmatpush.bf16.msra.mxu0 %v2295
    %2615 = vmatmul.bf16.gmra.mxu0 %v1674
    %v2616 = vpop.f32.mrf.mxu0
    %v2617 = vadd.f32 %v2603, %v2616
    %v2618 = vpop.f32.mrf.mxu0
    %v2619 = vadd.f32 %v2605, %v2618
    %2620 = vdwg.mxu0
    %2621 = vmatpush.bf16.msra.mxu0 %v2228
    %2622 = vmatpush.bf16.msra.mxu0 %v2224
    %2623 = vmatpush.bf16.msra.mxu0 %v2220
    %2624 = vmatpush.bf16.msra.mxu0 %v2216
    %2625 = vmatpush.bf16.msra.mxu0 %v2212
    %2626 = vmatpush.bf16.msra.mxu0 %v2208
    %2627 = vmatpush.bf16.msra.mxu0 %v2204
    %2628 = vmatpush.bf16.msra.mxu0 %v2200
    %2629 = vmatmul.bf16.gmra.mxu0 %v1671
    %v2630 = vpop.f32.mrf.mxu0
    %v2631 = vadd.f32 %v1808, %v2630
    %v2632 = vpop.f32.mrf.mxu0
    %v2633 = vadd.f32 %v1808, %v2632
    %2634 = vdwg.mxu0
    %2635 = vmatpush.bf16.msra.mxu0 %v2260
    %2636 = vmatpush.bf16.msra.mxu0 %v2256
    %2637 = vmatpush.bf16.msra.mxu0 %v2252
    %2638 = vmatpush.bf16.msra.mxu0 %v2248
    %2639 = vmatpush.bf16.msra.mxu0 %v2244
    %2640 = vmatpush.bf16.msra.mxu0 %v2240
    %2641 = vmatpush.bf16.msra.mxu0 %v2236
    %2642 = vmatpush.bf16.msra.mxu0 %v2232
    %2643 = vmatmul.bf16.gmra.mxu0 %v1672
    %v2644 = vpop.f32.mrf.mxu0
    %v2645 = vadd.f32 %v2631, %v2644
    %v2646 = vpop.f32.mrf.mxu0
    %v2647 = vadd.f32 %v2633, %v2646
    %2648 = vdwg.mxu0
    %2649 = vmatpush.bf16.msra.mxu0 %v2292
    %2650 = vmatpush.bf16.msra.mxu0 %v2288
    %2651 = vmatpush.bf16.msra.mxu0 %v2284
    %2652 = vmatpush.bf16.msra.mxu0 %v2280
    %2653 = vmatpush.bf16.msra.mxu0 %v2276
    %2654 = vmatpush.bf16.msra.mxu0 %v2272
    %2655 = vmatpush.bf16.msra.mxu0 %v2268
    %2656 = vmatpush.bf16.msra.mxu0 %v2264
    %2657 = vmatmul.bf16.gmra.mxu0 %v1673
    %v2658 = vpop.f32.mrf.mxu0
    %v2659 = vadd.f32 %v2645, %v2658
    %v2660 = vpop.f32.mrf.mxu0
    %v2661 = vadd.f32 %v2647, %v2660
    %2662 = vdwg.mxu0
    %2663 = vmatpush.bf16.msra.mxu0 %v2324
    %2664 = vmatpush.bf16.msra.mxu0 %v2320
    %2665 = vmatpush.bf16.msra.mxu0 %v2316
    %2666 = vmatpush.bf16.msra.mxu0 %v2312
    %2667 = vmatpush.bf16.msra.mxu0 %v2308
    %2668 = vmatpush.bf16.msra.mxu0 %v2304
    %2669 = vmatpush.bf16.msra.mxu0 %v2300
    %2670 = vmatpush.bf16.msra.mxu0 %v2296
    %2671 = vmatmul.bf16.gmra.mxu0 %v1674
    %v2672 = vpop.f32.mrf.mxu0
    %v2673 = vadd.f32 %v2659, %v2672
    %v2674 = vpop.f32.mrf.mxu0
    %v2675 = vadd.f32 %v2661, %v2674
    %2676 = vdwg.mxu0
    %v2677 = vmax.f32 %v2505, 0.0
    %v2678 = vmax.f32 %v2561, 0.0
    %v2679 = vmax.f32 %v2617, 0.0
    %v2680 = vmax.f32 %v2673, 0.0
    %v2681 = vmax.f32 %v2507, 0.0
    %v2682 = vmax.f32 %v2563, 0.0
    %v2683 = vmax.f32 %v2619, 0.0
    %v2684 = vmax.f32 %v2675, 0.0
    %v2685 = vpack.c.bf16 %v2681, %v2677
    %v2686 = vpack.c.bf16 %v2682, %v2678
    %v2687 = vpack.c.bf16 %v2683, %v2679
    %v2688 = vpack.c.bf16 %v2684, %v2680
    %v2689 = vld [vmem:[%s5] sm:$0xf]
    %v2690 = vld [vmem:[%s5 + $0x4] sm:$0xf]
    %v2691 = vld [vmem:[%s5 + $0x8] sm:$0xf]
    %v2692 = vld [vmem:[%s5 + $0xc] sm:$0xf]
    %v2693 = vld [vmem:[%s5 + $0x10] sm:$0xf]
    %v2694 = vld [vmem:[%s5 + $0x14] sm:$0xf]
    %v2695 = vld [vmem:[%s5 + $0x18] sm:$0xf]
    %v2696 = vld [vmem:[%s5 + $0x1c] sm:$0xf]
    %v2697 = vld [vmem:[%s5 + $0x20] sm:$0xf]
    %v2698 = vld [vmem:[%s5 + $0x24] sm:$0xf]
    %v2699 = vld [vmem:[%s5 + $0x28] sm:$0xf]
    %v2700 = vld [vmem:[%s5 + $0x2c] sm:$0xf]
    %v2701 = vld [vmem:[%s5 + $0x30] sm:$0xf]
    %v2702 = vld [vmem:[%s5 + $0x34] sm:$0xf]
    %v2703 = vld [vmem:[%s5 + $0x38] sm:$0xf]
    %v2704 = vld [vmem:[%s5 + $0x3c] sm:$0xf]
    %v2705 = vld [vmem:[%s5 + $0x40] sm:$0xf]
    %v2706 = vld [vmem:[%s5 + $0x44] sm:$0xf]
    %v2707 = vld [vmem:[%s5 + $0x48] sm:$0xf]
    %v2708 = vld [vmem:[%s5 + $0x4c] sm:$0xf]
    %v2709 = vld [vmem:[%s5 + $0x50] sm:$0xf]
    %v2710 = vld [vmem:[%s5 + $0x54] sm:$0xf]
    %v2711 = vld [vmem:[%s5 + $0x58] sm:$0xf]
    %v2712 = vld [vmem:[%s5 + $0x5c] sm:$0xf]
    %v2713 = vld [vmem:[%s5 + $0x60] sm:$0xf]
    %v2714 = vld [vmem:[%s5 + $0x64] sm:$0xf]
    %v2715 = vld [vmem:[%s5 + $0x68] sm:$0xf]
    %v2716 = vld [vmem:[%s5 + $0x6c] sm:$0xf]
    %v2717 = vld [vmem:[%s5 + $0x70] sm:$0xf]
    %v2718 = vld [vmem:[%s5 + $0x74] sm:$0xf]
    %v2719 = vld [vmem:[%s5 + $0x78] sm:$0xf]
    %v2720 = vld [vmem:[%s5 + $0x7c] sm:$0xf]
    %v2721 = vld [vmem:[%s5 + $0x80] sm:$0xf]
    %v2722 = vld [vmem:[%s5 + $0x84] sm:$0xf]
    %v2723 = vld [vmem:[%s5 + $0x88] sm:$0xf]
    %v2724 = vld [vmem:[%s5 + $0x8c] sm:$0xf]
    %v2725 = vld [vmem:[%s5 + $0x90] sm:$0xf]
    %v2726 = vld [vmem:[%s5 + $0x94] sm:$0xf]
    %v2727 = vld [vmem:[%s5 + $0x98] sm:$0xf]
    %v2728 = vld [vmem:[%s5 + $0x9c] sm:$0xf]
    %v2729 = vld [vmem:[%s5 + $0xa0] sm:$0xf]
    %v2730 = vld [vmem:[%s5 + $0xa4] sm:$0xf]
    %v2731 = vld [vmem:[%s5 + $0xa8] sm:$0xf]
    %v2732 = vld [vmem:[%s5 + $0xac] sm:$0xf]
    %v2733 = vld [vmem:[%s5 + $0xb0] sm:$0xf]
    %v2734 = vld [vmem:[%s5 + $0xb4] sm:$0xf]
    %v2735 = vld [vmem:[%s5 + $0xb8] sm:$0xf]
    %v2736 = vld [vmem:[%s5 + $0xbc] sm:$0xf]
    %v2737 = vld [vmem:[%s5 + $0xc0] sm:$0xf]
    %v2738 = vld [vmem:[%s5 + $0xc4] sm:$0xf]
    %v2739 = vld [vmem:[%s5 + $0xc8] sm:$0xf]
    %v2740 = vld [vmem:[%s5 + $0xcc] sm:$0xf]
    %v2741 = vld [vmem:[%s5 + $0xd0] sm:$0xf]
    %v2742 = vld [vmem:[%s5 + $0xd4] sm:$0xf]
    %v2743 = vld [vmem:[%s5 + $0xd8] sm:$0xf]
    %v2744 = vld [vmem:[%s5 + $0xdc] sm:$0xf]
    %v2745 = vld [vmem:[%s5 + $0xe0] sm:$0xf]
    %v2746 = vld [vmem:[%s5 + $0xe4] sm:$0xf]
    %v2747 = vld [vmem:[%s5 + $0xe8] sm:$0xf]
    %v2748 = vld [vmem:[%s5 + $0xec] sm:$0xf]
    %v2749 = vld [vmem:[%s5 + $0xf0] sm:$0xf]
    %v2750 = vld [vmem:[%s5 + $0xf4] sm:$0xf]
    %v2751 = vld [vmem:[%s5 + $0xf8] sm:$0xf]
    %v2752 = vld [vmem:[%s5 + $0xfc] sm:$0xf]
    %v2753 = vld [vmem:[%s6] sm:$0x1]
    %v2755 = vperm.slane %v2753, 0
    %v2821 = vunpack.c.l.b16 %v2689
    %v2822 = vunpack.c.l.b16 %v2690
    %v2823 = vunpack.c.l.b16 %v2691
    %v2824 = vunpack.c.l.b16 %v2692
    %v2825 = vunpack.c.l.b16 %v2693
    %v2826 = vunpack.c.l.b16 %v2694
    %v2827 = vunpack.c.l.b16 %v2695
    %v2828 = vunpack.c.l.b16 %v2696
    %v2829 = vunpack.c.l.b16 %v2697
    %v2830 = vunpack.c.l.b16 %v2698
    %v2831 = vunpack.c.l.b16 %v2699
    %v2832 = vunpack.c.l.b16 %v2700
    %v2833 = vunpack.c.l.b16 %v2701
    %v2834 = vunpack.c.l.b16 %v2702
    %v2835 = vunpack.c.l.b16 %v2703
    %v2836 = vunpack.c.l.b16 %v2704
    %v2837 = vunpack.c.l.b16 %v2705
    %v2838 = vunpack.c.l.b16 %v2706
    %v2839 = vunpack.c.l.b16 %v2707
    %v2840 = vunpack.c.l.b16 %v2708
    %v2841 = vunpack.c.l.b16 %v2709
    %v2842 = vunpack.c.l.b16 %v2710
    %v2843 = vunpack.c.l.b16 %v2711
    %v2844 = vunpack.c.l.b16 %v2712
    %v2845 = vunpack.c.l.b16 %v2713
    %v2846 = vunpack.c.l.b16 %v2714
    %v2847 = vunpack.c.l.b16 %v2715
    %v2848 = vunpack.c.l.b16 %v2716
    %v2849 = vunpack.c.l.b16 %v2717
    %v2850 = vunpack.c.l.b16 %v2718
    %v2851 = vunpack.c.l.b16 %v2719
    %v2852 = vunpack.c.l.b16 %v2720
    %v2853 = vunpack.c.l.b16 %v2721
    %v2854 = vunpack.c.l.b16 %v2722
    %v2855 = vunpack.c.l.b16 %v2723
    %v2856 = vunpack.c.l.b16 %v2724
    %v2857 = vunpack.c.l.b16 %v2725
    %v2858 = vunpack.c.l.b16 %v2726
    %v2859 = vunpack.c.l.b16 %v2727
    %v2860 = vunpack.c.l.b16 %v2728
    %v2861 = vunpack.c.l.b16 %v2729
    %v2862 = vunpack.c.l.b16 %v2730
    %v2863 = vunpack.c.l.b16 %v2731
    %v2864 = vunpack.c.l.b16 %v2732
    %v2865 = vunpack.c.l.b16 %v2733
    %v2866 = vunpack.c.l.b16 %v2734
    %v2867 = vunpack.c.l.b16 %v2735
    %v2868 = vunpack.c.l.b16 %v2736
    %v2869 = vunpack.c.l.b16 %v2737
    %v2870 = vunpack.c.l.b16 %v2738
    %v2871 = vunpack.c.l.b16 %v2739
    %v2872 = vunpack.c.l.b16 %v2740
    %v2873 = vunpack.c.l.b16 %v2741
    %v2874 = vunpack.c.l.b16 %v2742
    %v2875 = vunpack.c.l.b16 %v2743
    %v2876 = vunpack.c.l.b16 %v2744
    %v2877 = vunpack.c.l.b16 %v2745
    %v2878 = vunpack.c.l.b16 %v2746
    %v2879 = vunpack.c.l.b16 %v2747
    %v2880 = vunpack.c.l.b16 %v2748
    %v2881 = vunpack.c.l.b16 %v2749
    %v2882 = vunpack.c.l.b16 %v2750
    %v2883 = vunpack.c.l.b16 %v2751
    %v2884 = vunpack.c.l.b16 %v2752
    %v2885 = vpack.c.b16 %v2822, %v2821
    %v2886 = vpack.c.b16 %v2824, %v2823
    %v2887 = vpack.c.b16 %v2826, %v2825
    %v2888 = vpack.c.b16 %v2828, %v2827
    %v2889 = vpack.c.b16 %v2830, %v2829
    %v2890 = vpack.c.b16 %v2832, %v2831
    %v2891 = vpack.c.b16 %v2834, %v2833
    %v2892 = vpack.c.b16 %v2836, %v2835
    %v2893 = vpack.c.b16 %v2838, %v2837
    %v2894 = vpack.c.b16 %v2840, %v2839
    %v2895 = vpack.c.b16 %v2842, %v2841
    %v2896 = vpack.c.b16 %v2844, %v2843
    %v2897 = vpack.c.b16 %v2846, %v2845
    %v2898 = vpack.c.b16 %v2848, %v2847
    %v2899 = vpack.c.b16 %v2850, %v2849
    %v2900 = vpack.c.b16 %v2852, %v2851
    %v2901 = vpack.c.b16 %v2854, %v2853
    %v2902 = vpack.c.b16 %v2856, %v2855
    %v2903 = vpack.c.b16 %v2858, %v2857
    %v2904 = vpack.c.b16 %v2860, %v2859
    %v2905 = vpack.c.b16 %v2862, %v2861
    %v2906 = vpack.c.b16 %v2864, %v2863
    %v2907 = vpack.c.b16 %v2866, %v2865
    %v2908 = vpack.c.b16 %v2868, %v2867
    %v2909 = vpack.c.b16 %v2870, %v2869
    %v2910 = vpack.c.b16 %v2872, %v2871
    %v2911 = vpack.c.b16 %v2874, %v2873
    %v2912 = vpack.c.b16 %v2876, %v2875
    %v2913 = vpack.c.b16 %v2878, %v2877
    %v2914 = vpack.c.b16 %v2880, %v2879
    %v2915 = vpack.c.b16 %v2882, %v2881
    %v2916 = vpack.c.b16 %v2884, %v2883
    %2949 = vmatpush.bf16.msra.mxu0 %v2892
    %2950 = vmatpush.bf16.msra.mxu0 %v2891
    %2951 = vmatpush.bf16.msra.mxu0 %v2890
    %2952 = vmatpush.bf16.msra.mxu0 %v2889
    %2953 = vmatpush.bf16.msra.mxu0 %v2888
    %2954 = vmatpush.bf16.msra.mxu0 %v2887
    %2955 = vmatpush.bf16.msra.mxu0 %v2886
    %2956 = vmatpush.bf16.msra.mxu0 %v2885
    %2957 = vmatmul.bf16.gmra.mxu0 %v2685
    %v2958 = vpop.f32.mrf.mxu0
    %v2959 = vadd.f32 %v2755, %v2958
    %v2960 = vpop.f32.mrf.mxu0
    %v2961 = vadd.f32 %v2755, %v2960
    %2962 = vdwg.mxu0
    %2963 = vmatpush.bf16.msra.mxu0 %v2900
    %2964 = vmatpush.bf16.msra.mxu0 %v2899
    %2965 = vmatpush.bf16.msra.mxu0 %v2898
    %2966 = vmatpush.bf16.msra.mxu0 %v2897
    %2967 = vmatpush.bf16.msra.mxu0 %v2896
    %2968 = vmatpush.bf16.msra.mxu0 %v2895
    %2969 = vmatpush.bf16.msra.mxu0 %v2894
    %2970 = vmatpush.bf16.msra.mxu0 %v2893
    %2971 = vmatmul.bf16.gmra.mxu0 %v2686
    %v2972 = vpop.f32.mrf.mxu0
    %v2973 = vadd.f32 %v2959, %v2972
    %v2974 = vpop.f32.mrf.mxu0
    %v2975 = vadd.f32 %v2961, %v2974
    %2976 = vdwg.mxu0
    %2977 = vmatpush.bf16.msra.mxu0 %v2908
    %2978 = vmatpush.bf16.msra.mxu0 %v2907
    %2979 = vmatpush.bf16.msra.mxu0 %v2906
    %2980 = vmatpush.bf16.msra.mxu0 %v2905
    %2981 = vmatpush.bf16.msra.mxu0 %v2904
    %2982 = vmatpush.bf16.msra.mxu0 %v2903
    %2983 = vmatpush.bf16.msra.mxu0 %v2902
    %2984 = vmatpush.bf16.msra.mxu0 %v2901
    %2985 = vmatmul.bf16.gmra.mxu0 %v2687
    %v2986 = vpop.f32.mrf.mxu0
    %v2987 = vadd.f32 %v2973, %v2986
    %v2988 = vpop.f32.mrf.mxu0
    %v2989 = vadd.f32 %v2975, %v2988
    %2990 = vdwg.mxu0
    %2991 = vmatpush.bf16.msra.mxu0 %v2916
    %2992 = vmatpush.bf16.msra.mxu0 %v2915
    %2993 = vmatpush.bf16.msra.mxu0 %v2914
    %2994 = vmatpush.bf16.msra.mxu0 %v2913
    %2995 = vmatpush.bf16.msra.mxu0 %v2912
    %2996 = vmatpush.bf16.msra.mxu0 %v2911
    %2997 = vmatpush.bf16.msra.mxu0 %v2910
    %2998 = vmatpush.bf16.msra.mxu0 %v2909
    %2999 = vmatmul.bf16.gmra.mxu0 %v2688
    %v3000 = vpop.f32.mrf.mxu0
    %v3001 = vadd.f32 %v2987, %v3000
    %v3002 = vpop.f32.mrf.mxu0
    %v3003 = vadd.f32 %v2989, %v3002
    %3004 = vdwg.mxu0
    %3005 = vst [vmem:[#allocation7] sm:$0xff] %v3001
    %3006 = vst [vmem:[#allocation7 + $0x8] sm:$0xff] %v3003
    // Predicated region
    $region38: #{net2_forward.1} parent=1 // pred_check
      _
    $region39: #{net2_forward.1} parent=1 // pred_check_branch
      %3008 = sbr.rel (0) target = $region41
    $region40: #{net2_forward.1} parent=1 // pred_region
      %3010 = vsyncadd [#allocation4], 128
      %s3011 = sshll.u32 [#allocation7], 4
      %s3012 = int_to_ptr.vmem [resolvable:$true] %s3011
      %s3013 = sshll.u32 %s7, 4
      %s3014 = int_to_ptr.hbm [resolvable:$true] %s3013
      %3019 = dma.vmem_to_hbm [thread:$0]  %s3012, 128, %s3014, [#allocation4], 128, 128, 8
    $region41: #{net2_forward.1} parent=1 // pred_fallthru
      _
    // Predicated region
    $region42: #{net2_forward.1} parent=1 // pred_check
      _
    $region43: #{net2_forward.1} parent=1 // pred_check_branch
      %3021 = sbr.rel (0) target = $region45
    $region44: #{net2_forward.1} parent=1 // pred_region
      %3023 = dma.done [#allocation4], 256
    $region45: #{net2_forward.1} parent=1 // pred_fallthru
      _
    %3024 = vsyncpa [#allocation3], 1
    %3025 = vsyncpa [#allocation6], 1
    %3026 = vsyncpa [#allocation4], 1

</llo_original>
